<compile_context>
chip_gen: v7x
topology: tpu7x:2x2x1
jax: 0.10.0
libtpu: 0.0.40
codegen_flags: <defaults>
</compile_context>

<pallas_src>
import functools
import math

import jax
import jax.numpy as jnp
from jax import lax
from jax.experimental import pallas as pl
from jax.experimental.pallas import tpu as pltpu


def _round_up(x, m):
    return ((x + m - 1) // m) * m


def _pick_batch_tile(batch, seq, target_rows=256):
    """Largest Bt with B % Bt == 0, Bt*S ~ target_rows, and >= 2 grid steps
    when possible (keeps both v7x TensorCores busy)."""
    bt = max(1, min(batch, target_rows // max(seq, 1)))
    while bt > 1 and (batch % bt != 0 or batch // bt < 2):
        bt -= 1
    return bt


def _encoder_kernel(intent_ref, seq_ref,
                    w_seq_ref, w_int_ref, b_lin_ref,
                    gamma_ref, beta_ref,
                    wq_ref, bq_ref, wk_ref, bk_ref, wv_ref, bv_ref,
                    out_ref, *, d_model, hidden_dim, eps):
    """One grid step == Bt batch elements. All parameter refs are resident."""
    f32 = jnp.float32
    bt, s_len, d_in = seq_ref.shape
    d_pad = out_ref.shape[-1]

    x = seq_ref[...].reshape(bt * s_len, d_in)          # [Bt*S, D]
    intent = intent_ref[...].reshape(bt, -1)            # [Bt, L]

    # ---- Linear over cat([sequence_output, intent_replicas], -1) ----------
    # Split matmul; the bias is folded into the per-batch intent row.
    row = jnp.dot(intent, w_int_ref[...],
                  preferred_element_type=f32) + b_lin_ref[...]      # [Bt, Dp]
    t = jnp.dot(x, w_seq_ref[...], preferred_element_type=f32)      # [Bt*S, Dp]
    t = t.reshape(bt, s_len, d_pad) + row[:, None, :]               # [Bt, S, Dp]

    # ---- LayerNorm over the real d_model columns ---------------------------
    # Padded columns of t are exactly 0 (zero-padded weights/bias), so the
    # full-row sums already give the correct E[x] / E[x^2] over d_model cols.
    t_flat = t.reshape(bt * s_len, d_pad)
    inv_d = 1.0 / d_model
    mean = jnp.sum(t_flat, axis=-1, keepdims=True) * inv_d
    mean_sq = jnp.sum(t_flat * t_flat, axis=-1, keepdims=True) * inv_d
    var = mean_sq - mean * mean
    inv_std = lax.rsqrt(var + eps)
    # gamma/beta padded cols are 0 -> padded cols of `normed` stay exactly 0.
    normed = (t_flat - mean) * inv_std * gamma_ref[...] + beta_ref[...]

    # ---- Self attention (query == key == value) ----------------------------
    q = jnp.dot(normed, wq_ref[...], preferred_element_type=f32) + bq_ref[...]
    k = jnp.dot(normed, wk_ref[...], preferred_element_type=f32) + bk_ref[...]
    v = jnp.dot(normed, wv_ref[...], preferred_element_type=f32) + bv_ref[...]
    q3 = q.reshape(bt, s_len, d_pad)
    k3 = k.reshape(bt, s_len, d_pad)
    v3 = v.reshape(bt, s_len, d_pad)

    scores = jnp.einsum('bqd,bkd->bqk', q3, k3,
                        preferred_element_type=f32)                 # [Bt, S, S]
    scores = scores - jnp.max(scores, axis=-1, keepdims=True)
    exp_s = jnp.exp(scores)
    inv_sum = pl.reciprocal(jnp.sum(exp_s, axis=-1, keepdims=True), approx=True)
    # NOTE: module divides by sqrt(hidden_dim) AFTER softmax (intentional quirk).
    probs = exp_s * (inv_sum * (1.0 / math.sqrt(hidden_dim)))
    attn = jnp.einsum('bqk,bkd->bqd', probs, v3,
                      preferred_element_type=f32)                   # [Bt, S, Dp]

    # ---- Residual ----------------------------------------------------------
    out_ref[...] = (attn + t).astype(out_ref.dtype)


def prepare_encoder_params(torch_params, *, d_model, lane=128):
    """ONE-TIME conversion of PyTorch-layout params to the kernel layout.

    Weights are transposed to [in, out] and the model (output) dim is
    ZERO-padded to a multiple of 128 lanes.  The zero padding is a hard
    correctness invariant: LayerNorm statistics and the padded q/k/v columns
    rely on padded weight/bias/gamma/beta entries being exactly 0.
    """
    (w_lin, b_lin, gamma, beta, wq, bq, wk, bk, wv, bv) = torch_params
    d_pad = _round_up(d_model, lane)

    def pad_last(a):
        return jnp.pad(a, [(0, 0)] * (a.ndim - 1) + [(0, d_pad - a.shape[-1])])

    def pad_square_t(w):                       # [D, D] PyTorch -> [Dp, Dp] kernel
        wt = w.T
        return jnp.pad(wt, [(0, d_pad - wt.shape[0]), (0, d_pad - wt.shape[1])])

    w_lin_t = w_lin.T                          # [D + L, D]
    w_seq = pad_last(w_lin_t[:d_model])        # [D, Dp]  (seq part of the concat)
    w_int = pad_last(w_lin_t[d_model:])        # [L, Dp]  (intent part of the concat)

    return (w_seq, w_int,
            pad_last(b_lin.reshape(1, -1)),
            pad_last(gamma.reshape(1, -1)),
            pad_last(beta.reshape(1, -1)),
            pad_square_t(wq), pad_last(bq.reshape(1, -1)),
            pad_square_t(wk), pad_last(bk.reshape(1, -1)),
            pad_square_t(wv), pad_last(bv.reshape(1, -1)))


def encoder_forward(intent_logits, sequence_output, kernel_params, *,
                    d_model, eps=1e-5, batch_tile=None):
    """intent_logits: [B, L]; sequence_output: [B, S, D]. Returns [B, S, D]."""
    (w_seq, w_int, b_lin, gamma, beta,
     wq, bq, wk, bk, wv, bv) = kernel_params
    B, S, D = sequence_output.shape
    L = intent_logits.shape[-1]
    Dp = w_seq.shape[1]

    bt = batch_tile if batch_tile is not None else _pick_batch_tile(B, S)
    assert B % bt == 0, (B, bt)

    # [B, 1, L] so the batch-tiled BlockSpec keeps its last two dims full-size.
    intent3 = intent_logits.reshape(B, 1, L)

    kernel = functools.partial(_encoder_kernel, d_model=d_model,
                               hidden_dim=d_model, eps=eps)
    const = lambda b: (0, 0)     # weights resident in VMEM across grid steps

    out_padded = pl.pallas_call(
        kernel,
        out_shape=jax.ShapeDtypeStruct((B, S, Dp), sequence_output.dtype),
        grid=(B // bt,),
        in_specs=[
            pl.BlockSpec((bt, 1, L), lambda b: (b, 0, 0)),   # intent_logits
            pl.BlockSpec((bt, S, D), lambda b: (b, 0, 0)),   # sequence_output
            pl.BlockSpec((D, Dp), const),                    # W_lin (seq part, [in,out])
            pl.BlockSpec((L, Dp), const),                    # W_lin (intent part)
            pl.BlockSpec((1, Dp), const),                    # b_lin
            pl.BlockSpec((1, Dp), const),                    # LN gamma
            pl.BlockSpec((1, Dp), const),                    # LN beta
            pl.BlockSpec((Dp, Dp), const),                   # Wq
            pl.BlockSpec((1, Dp), const),                    # bq
            pl.BlockSpec((Dp, Dp), const),                   # Wk
            pl.BlockSpec((1, Dp), const),                    # bk
            pl.BlockSpec((Dp, Dp), const),                   # Wv
            pl.BlockSpec((1, Dp), const),                    # bv
        ],
        out_specs=pl.BlockSpec((bt, S, Dp), lambda b: (b, 0, 0)),
        compiler_params=pltpu.CompilerParams(
            dimension_semantics=("parallel",),               # batch split across TCs
            vmem_limit_bytes=48 * 1024 * 1024,               # explicit; fits all gens
        ),
    )(intent3, sequence_output, w_seq, w_int, b_lin, gamma, beta,
      wq, bq, wk, bk, wv, bv)

    if Dp == D:
        return out_padded
    return out_padded[..., :D]


def encoder_reference(intent_logits, sequence_output, torch_params, eps=1e-5):
    """Pure-JAX reference matching the PyTorch module (eval mode), f32/HIGHEST."""
    (w_lin, b_lin, gamma, beta, wq, bq, wk, bk, wv, bv) = torch_params
    B, S, D = sequence_output.shape
    mm = functools.partial(jnp.matmul, precision=lax.Precision.HIGHEST)
    rep = jnp.broadcast_to(intent_logits[:, None, :],
                           (B, S, intent_logits.shape[-1]))
    concat = jnp.concatenate([sequence_output, rep], axis=-1)
    t = mm(concat, w_lin.T) + b_lin
    mean = jnp.mean(t, axis=-1, keepdims=True)
    var = jnp.mean((t - mean) ** 2, axis=-1, keepdims=True)
    normed = (t - mean) / jnp.sqrt(var + eps) * gamma + beta
    q = mm(normed, wq.T) + bq
    k = mm(normed, wk.T) + bk
    v = mm(normed, wv.T) + bv
    scores = jax.nn.softmax(mm(q, jnp.swapaxes(k, -1, -2)), axis=-1) / math.sqrt(D)
    return mm(scores, v) + t


if __name__ == "__main__":
    # Small shapes consistent with the module:
    #   batch=2, seq=8, input_dim=32, num_intent_labels=16
    B, S, D, L = 2, 8, 32, 16

    key = jax.random.PRNGKey(0)
    keys = jax.random.split(key, 10)

    intent_logits = jax.random.normal(keys[0], (B, L), dtype=jnp.float32)
    sequence_output = jax.random.normal(keys[1], (B, S, D), dtype=jnp.float32)

    def linear_init(kw, kb, out_dim, in_dim):
        bound = 1.0 / math.sqrt(in_dim)
        w = jax.random.uniform(kw, (out_dim, in_dim), minval=-bound,
                               maxval=bound, dtype=jnp.float32)
        b = jax.random.uniform(kb, (out_dim,), minval=-bound,
                               maxval=bound, dtype=jnp.float32)
        return w, b

    w_lin, b_lin = linear_init(keys[2], keys[3], D, D + L)   # Linear(D+L -> D)
    gamma = jnp.ones((D,), jnp.float32)                      # LayerNorm params
    beta = jnp.zeros((D,), jnp.float32)
    wq, bq = linear_init(keys[4], keys[5], D, D)             # query layer
    wk, bk = linear_init(keys[6], keys[7], D, D)             # key layer
    wv, bv = linear_init(keys[8], keys[9], D, D)             # value layer

    torch_params = (w_lin, b_lin, gamma, beta, wq, bq, wk, bk, wv, bv)
    kernel_params = prepare_encoder_params(torch_params, d_model=D)  # one-time

    out = encoder_forward(intent_logits, sequence_output, kernel_params,
                          d_model=D)
    out = jax.block_until_ready(out)

    ref = encoder_reference(intent_logits, sequence_output, torch_params)
    assert out.shape == (B, S, D)
    max_err = float(jnp.max(jnp.abs(out - ref)))
    # Tolerance loosened vs. the f32/HIGHEST reference: the kernel now uses
    # default-precision (single-pass) MXU matmuls and an approx reciprocal.
    assert jnp.allclose(out, ref, atol=7.5e-2, rtol=7.5e-2), max_err

    print("KERNEL_OK")
</pallas_src>

<mosaic_0001>
module attributes {stable_mosaic.version = 11 : i64} {
  func.func @_encoder_kernel(%arg0: i32, %arg1: memref<1x1x16xf32, #tpu.memory_space<vmem>>, %arg2: memref<1x8x32xf32, #tpu.memory_space<vmem>>, %arg3: memref<32x128xf32, #tpu.memory_space<vmem>>, %arg4: memref<16x128xf32, #tpu.memory_space<vmem>>, %arg5: memref<1x128xf32, #tpu.memory_space<vmem>>, %arg6: memref<1x128xf32, #tpu.memory_space<vmem>>, %arg7: memref<1x128xf32, #tpu.memory_space<vmem>>, %arg8: memref<128x128xf32, #tpu.memory_space<vmem>>, %arg9: memref<1x128xf32, #tpu.memory_space<vmem>>, %arg10: memref<128x128xf32, #tpu.memory_space<vmem>>, %arg11: memref<1x128xf32, #tpu.memory_space<vmem>>, %arg12: memref<128x128xf32, #tpu.memory_space<vmem>>, %arg13: memref<1x128xf32, #tpu.memory_space<vmem>>, %arg14: memref<1x8x128xf32, #tpu.memory_space<vmem>>) attributes {dimension_semantics = [#tpu.dimension_semantics<parallel>], iteration_bounds = array<i64: 2>, scalar_prefetch = 0 : i64, scratch_operands = 0 : i64, tpu.core_type = #tpu.core_type<tc>, window_params = [{transform_indices = @transform_0, window_bounds = array<i64: 1, 1, 16>}, {transform_indices = @transform_1, window_bounds = array<i64: 1, 8, 32>}, {pipeline_mode = #tpu.pipeline_mode<synchronous>, transform_indices = @transform_2, window_bounds = array<i64: 32, 128>}, {pipeline_mode = #tpu.pipeline_mode<synchronous>, transform_indices = @transform_3, window_bounds = array<i64: 16, 128>}, {pipeline_mode = #tpu.pipeline_mode<synchronous>, transform_indices = @transform_4, window_bounds = array<i64: 1, 128>}, {pipeline_mode = #tpu.pipeline_mode<synchronous>, transform_indices = @transform_5, window_bounds = array<i64: 1, 128>}, {pipeline_mode = #tpu.pipeline_mode<synchronous>, transform_indices = @transform_6, window_bounds = array<i64: 1, 128>}, {pipeline_mode = #tpu.pipeline_mode<synchronous>, transform_indices = @transform_7, window_bounds = array<i64: 128, 128>}, {pipeline_mode = #tpu.pipeline_mode<synchronous>, transform_indices = @transform_8, window_bounds = array<i64: 1, 128>}, {pipeline_mode = #tpu.pipeline_mode<synchronous>, transform_indices = @transform_9, window_bounds = array<i64: 128, 128>}, {pipeline_mode = #tpu.pipeline_mode<synchronous>, transform_indices = @transform_10, window_bounds = array<i64: 1, 128>}, {pipeline_mode = #tpu.pipeline_mode<synchronous>, transform_indices = @transform_11, window_bounds = array<i64: 128, 128>}, {pipeline_mode = #tpu.pipeline_mode<synchronous>, transform_indices = @transform_12, window_bounds = array<i64: 1, 128>}, {transform_indices = @transform_13, window_bounds = array<i64: 1, 8, 128>}]} {
    %c0 = arith.constant 0 : index
    %c0_0 = arith.constant 0 : index
    %c0_1 = arith.constant 0 : index
    %0 = vector.load %arg2[%c0, %c0_0, %c0_1] : memref<1x8x32xf32, #tpu.memory_space<vmem>>, vector<1x8x32xf32>
    %1 = vector.shape_cast %0 : vector<1x8x32xf32> to vector<8x32xf32>
    %c0_2 = arith.constant 0 : index
    %c0_3 = arith.constant 0 : index
    %c0_4 = arith.constant 0 : index
    %2 = vector.load %arg1[%c0_2, %c0_3, %c0_4] : memref<1x1x16xf32, #tpu.memory_space<vmem>>, vector<1x1x16xf32>
    %3 = vector.shape_cast %2 : vector<1x1x16xf32> to vector<1x16xf32>
    %c0_5 = arith.constant 0 : index
    %c0_6 = arith.constant 0 : index
    %4 = vector.load %arg4[%c0_5, %c0_6] : memref<16x128xf32, #tpu.memory_space<vmem>>, vector<16x128xf32>
    %cst = arith.constant dense<0.000000e+00> : vector<1x128xf32>
    %5 = tpu.matmul %3, %4, %cst {dimension_numbers = #tpu.dot_dimension_numbers<[1], [0], [0], [1], [0, 0, 1, 1], [], []>} : vector<1x16xf32>, vector<16x128xf32>, vector<1x128xf32> -> vector<1x128xf32>
    %c0_7 = arith.constant 0 : index
    %c0_8 = arith.constant 0 : index
    %6 = vector.load %arg5[%c0_7, %c0_8] : memref<1x128xf32, #tpu.memory_space<vmem>>, vector<1x128xf32>
    %7 = arith.addf %5, %6 : vector<1x128xf32>
    %c0_9 = arith.constant 0 : index
    %c0_10 = arith.constant 0 : index
    %8 = vector.load %arg3[%c0_9, %c0_10] : memref<32x128xf32, #tpu.memory_space<vmem>>, vector<32x128xf32>
    %cst_11 = arith.constant dense<0.000000e+00> : vector<8x128xf32>
    %9 = tpu.matmul %1, %8, %cst_11 {dimension_numbers = #tpu.dot_dimension_numbers<[1], [0], [0], [1], [0, 0, 1, 1], [], []>} : vector<8x32xf32>, vector<32x128xf32>, vector<8x128xf32> -> vector<8x128xf32>
    %10 = vector.shape_cast %9 : vector<8x128xf32> to vector<1x8x128xf32>
    %11 = vector.shape_cast %7 : vector<1x128xf32> to vector<1x1x128xf32>
    %12 = vector.broadcast %11 : vector<1x1x128xf32> to vector<1x8x128xf32>
    %13 = arith.addf %10, %12 : vector<1x8x128xf32>
    %14 = vector.shape_cast %13 : vector<1x8x128xf32> to vector<8x128xf32>
    %cst_12 = arith.constant dense<0.000000e+00> : vector<8xf32>
    %15 = vector.multi_reduction <add>, %14, %cst_12 [1] : vector<8x128xf32> to vector<8xf32>
    %16 = vector.shape_cast %15 : vector<8xf32> to vector<8x1xf32>
    %cst_13 = arith.constant 3.125000e-02 : f32
    %17 = vector.broadcast %cst_13 : f32 to vector<8x1xf32>
    %18 = arith.mulf %16, %17 : vector<8x1xf32>
    %19 = arith.mulf %14, %14 : vector<8x128xf32>
    %cst_14 = arith.constant dense<0.000000e+00> : vector<8xf32>
    %20 = vector.multi_reduction <add>, %19, %cst_14 [1] : vector<8x128xf32> to vector<8xf32>
    %21 = vector.shape_cast %20 : vector<8xf32> to vector<8x1xf32>
    %cst_15 = arith.constant 3.125000e-02 : f32
    %22 = vector.broadcast %cst_15 : f32 to vector<8x1xf32>
    %23 = arith.mulf %21, %22 : vector<8x1xf32>
    %24 = arith.mulf %18, %18 : vector<8x1xf32>
    %25 = arith.subf %23, %24 : vector<8x1xf32>
    %cst_16 = arith.constant 9.99999974E-6 : f32
    %26 = vector.broadcast %cst_16 : f32 to vector<8x1xf32>
    %27 = arith.addf %25, %26 : vector<8x1xf32>
    %28 = math.rsqrt %27 : vector<8x1xf32>
    %29 = vector.broadcast %18 : vector<8x1xf32> to vector<8x128xf32>
    %30 = arith.subf %14, %29 : vector<8x128xf32>
    %31 = vector.broadcast %28 : vector<8x1xf32> to vector<8x128xf32>
    %32 = arith.mulf %30, %31 : vector<8x128xf32>
    %c0_17 = arith.constant 0 : index
    %c0_18 = arith.constant 0 : index
    %33 = vector.load %arg6[%c0_17, %c0_18] : memref<1x128xf32, #tpu.memory_space<vmem>>, vector<1x128xf32>
    %34 = vector.broadcast %33 : vector<1x128xf32> to vector<8x128xf32>
    %35 = arith.mulf %32, %34 : vector<8x128xf32>
    %c0_19 = arith.constant 0 : index
    %c0_20 = arith.constant 0 : index
    %36 = vector.load %arg7[%c0_19, %c0_20] : memref<1x128xf32, #tpu.memory_space<vmem>>, vector<1x128xf32>
    %37 = vector.broadcast %36 : vector<1x128xf32> to vector<8x128xf32>
    %38 = arith.addf %35, %37 : vector<8x128xf32>
    %c0_21 = arith.constant 0 : index
    %c0_22 = arith.constant 0 : index
    %39 = vector.load %arg8[%c0_21, %c0_22] : memref<128x128xf32, #tpu.memory_space<vmem>>, vector<128x128xf32>
    %cst_23 = arith.constant dense<0.000000e+00> : vector<8x128xf32>
    %40 = tpu.matmul %38, %39, %cst_23 {dimension_numbers = #tpu.dot_dimension_numbers<[1], [0], [0], [1], [0, 0, 1, 1], [], []>} : vector<8x128xf32>, vector<128x128xf32>, vector<8x128xf32> -> vector<8x128xf32>
    %c0_24 = arith.constant 0 : index
    %c0_25 = arith.constant 0 : index
    %41 = vector.load %arg9[%c0_24, %c0_25] : memref<1x128xf32, #tpu.memory_space<vmem>>, vector<1x128xf32>
    %42 = vector.broadcast %41 : vector<1x128xf32> to vector<8x128xf32>
    %43 = arith.addf %40, %42 : vector<8x128xf32>
    %c0_26 = arith.constant 0 : index
    %c0_27 = arith.constant 0 : index
    %44 = vector.load %arg10[%c0_26, %c0_27] : memref<128x128xf32, #tpu.memory_space<vmem>>, vector<128x128xf32>
    %cst_28 = arith.constant dense<0.000000e+00> : vector<8x128xf32>
    %45 = tpu.matmul %38, %44, %cst_28 {dimension_numbers = #tpu.dot_dimension_numbers<[1], [0], [0], [1], [0, 0, 1, 1], [], []>} : vector<8x128xf32>, vector<128x128xf32>, vector<8x128xf32> -> vector<8x128xf32>
    %c0_29 = arith.constant 0 : index
    %c0_30 = arith.constant 0 : index
    %46 = vector.load %arg11[%c0_29, %c0_30] : memref<1x128xf32, #tpu.memory_space<vmem>>, vector<1x128xf32>
    %47 = vector.broadcast %46 : vector<1x128xf32> to vector<8x128xf32>
    %48 = arith.addf %45, %47 : vector<8x128xf32>
    %c0_31 = arith.constant 0 : index
    %c0_32 = arith.constant 0 : index
    %49 = vector.load %arg12[%c0_31, %c0_32] : memref<128x128xf32, #tpu.memory_space<vmem>>, vector<128x128xf32>
    %cst_33 = arith.constant dense<0.000000e+00> : vector<8x128xf32>
    %50 = tpu.matmul %38, %49, %cst_33 {dimension_numbers = #tpu.dot_dimension_numbers<[1], [0], [0], [1], [0, 0, 1, 1], [], []>} : vector<8x128xf32>, vector<128x128xf32>, vector<8x128xf32> -> vector<8x128xf32>
    %c0_34 = arith.constant 0 : index
    %c0_35 = arith.constant 0 : index
    %51 = vector.load %arg13[%c0_34, %c0_35] : memref<1x128xf32, #tpu.memory_space<vmem>>, vector<1x128xf32>
    %52 = vector.broadcast %51 : vector<1x128xf32> to vector<8x128xf32>
    %53 = arith.addf %50, %52 : vector<8x128xf32>
    %54 = vector.shape_cast %43 : vector<8x128xf32> to vector<1x8x128xf32>
    %55 = vector.shape_cast %48 : vector<8x128xf32> to vector<1x8x128xf32>
    %56 = vector.shape_cast %53 : vector<8x128xf32> to vector<1x8x128xf32>
    "tpu.trace_start"() <{level = 10 : i32, message = "bqd,bkd->bqk"}> : () -> ()
    %cst_36 = arith.constant dense<0.000000e+00> : vector<1x8x8xf32>
    %57 = tpu.matmul %54, %55, %cst_36 {dimension_numbers = #tpu.dot_dimension_numbers<[2], [2], [1], [1], [0, 0, 0, 1, 1, 1], [0], [0]>} : vector<1x8x128xf32>, vector<1x8x128xf32>, vector<1x8x8xf32> -> vector<1x8x8xf32>
    "tpu.trace_stop"() : () -> ()
    %cst_37 = arith.constant dense<0xFF800000> : vector<1x8xf32>
    %58 = vector.multi_reduction <maximumf>, %57, %cst_37 [2] : vector<1x8x8xf32> to vector<1x8xf32>
    %59 = vector.shape_cast %58 : vector<1x8xf32> to vector<1x8x1xf32>
    %60 = vector.broadcast %59 : vector<1x8x1xf32> to vector<1x8x8xf32>
    %61 = arith.subf %57, %60 : vector<1x8x8xf32>
    %62 = math.exp %61 : vector<1x8x8xf32>
    %cst_38 = arith.constant dense<0.000000e+00> : vector<1x8xf32>
    %63 = vector.multi_reduction <add>, %62, %cst_38 [2] : vector<1x8x8xf32> to vector<1x8xf32>
    %64 = vector.shape_cast %63 : vector<1x8xf32> to vector<1x8x1xf32>
    %65 = tpu.reciprocal %64 {approx = true} : vector<1x8x1xf32> -> vector<1x8x1xf32>
    %cst_39 = arith.constant 0.176776692 : f32
    %66 = vector.broadcast %cst_39 : f32 to vector<1x8x1xf32>
    %67 = arith.mulf %65, %66 : vector<1x8x1xf32>
    %68 = vector.broadcast %67 : vector<1x8x1xf32> to vector<1x8x8xf32>
    %69 = arith.mulf %62, %68 : vector<1x8x8xf32>
    "tpu.trace_start"() <{level = 10 : i32, message = "bqk,bkd->bqd"}> : () -> ()
    %cst_40 = arith.constant dense<0.000000e+00> : vector<1x8x128xf32>
    %70 = tpu.matmul %69, %56, %cst_40 {dimension_numbers = #tpu.dot_dimension_numbers<[2], [1], [1], [2], [0, 0, 0, 1, 1, 2], [0], [0]>} : vector<1x8x8xf32>, vector<1x8x128xf32>, vector<1x8x128xf32> -> vector<1x8x128xf32>
    "tpu.trace_stop"() : () -> ()
    %71 = arith.addf %70, %13 : vector<1x8x128xf32>
    %c0_41 = arith.constant 0 : index
    %c0_42 = arith.constant 0 : index
    %c0_43 = arith.constant 0 : index
    %72 = vector.load %arg14[%c0_41, %c0_42, %c0_43] : memref<1x8x128xf32, #tpu.memory_space<vmem>>, vector<1x8x128xf32>
    tpu.vector_store %arg14[%c0_41, %c0_42, %c0_43], %71 {strides = array<i32>} : memref<1x8x128xf32, #tpu.memory_space<vmem>>, vector<1x8x128xf32>,
    return
  }
  func.func @transform_0(%arg0: i32) -> (i32, i32, i32) {
    %c0_i32 = arith.constant 0 : i32
    %c0_i32_0 = arith.constant 0 : i32
    %c0_i32_1 = arith.constant 0 : i32
    return %arg0, %c0_i32, %c0_i32_0 : i32, i32, i32
  }
  func.func @transform_1(%arg0: i32) -> (i32, i32, i32) {
    %c0_i32 = arith.constant 0 : i32
    %c0_i32_0 = arith.constant 0 : i32
    %c0_i32_1 = arith.constant 0 : i32
    return %arg0, %c0_i32, %c0_i32_0 : i32, i32, i32
  }
  func.func @transform_2(%arg0: i32) -> (i32, i32) {
    %c0_i32 = arith.constant 0 : i32
    %c0_i32_0 = arith.constant 0 : i32
    %c0_i32_1 = arith.constant 0 : i32
    return %c0_i32, %c0_i32_0 : i32, i32
  }
  func.func @transform_3(%arg0: i32) -> (i32, i32) {
    %c0_i32 = arith.constant 0 : i32
    %c0_i32_0 = arith.constant 0 : i32
    %c0_i32_1 = arith.constant 0 : i32
    return %c0_i32, %c0_i32_0 : i32, i32
  }
  func.func @transform_4(%arg0: i32) -> (i32, i32) {
    %c0_i32 = arith.constant 0 : i32
    %c0_i32_0 = arith.constant 0 : i32
    %c0_i32_1 = arith.constant 0 : i32
    return %c0_i32, %c0_i32_0 : i32, i32
  }
  func.func @transform_5(%arg0: i32) -> (i32, i32) {
    %c0_i32 = arith.constant 0 : i32
    %c0_i32_0 = arith.constant 0 : i32
    %c0_i32_1 = arith.constant 0 : i32
    return %c0_i32, %c0_i32_0 : i32, i32
  }
  func.func @transform_6(%arg0: i32) -> (i32, i32) {
    %c0_i32 = arith.constant 0 : i32
    %c0_i32_0 = arith.constant 0 : i32
    %c0_i32_1 = arith.constant 0 : i32
    return %c0_i32, %c0_i32_0 : i32, i32
  }
  func.func @transform_7(%arg0: i32) -> (i32, i32) {
    %c0_i32 = arith.constant 0 : i32
    %c0_i32_0 = arith.constant 0 : i32
    %c0_i32_1 = arith.constant 0 : i32
    return %c0_i32, %c0_i32_0 : i32, i32
  }
  func.func @transform_8(%arg0: i32) -> (i32, i32) {
    %c0_i32 = arith.constant 0 : i32
    %c0_i32_0 = arith.constant 0 : i32
    %c0_i32_1 = arith.constant 0 : i32
    return %c0_i32, %c0_i32_0 : i32, i32
  }
  func.func @transform_9(%arg0: i32) -> (i32, i32) {
    %c0_i32 = arith.constant 0 : i32
    %c0_i32_0 = arith.constant 0 : i32
    %c0_i32_1 = arith.constant 0 : i32
    return %c0_i32, %c0_i32_0 : i32, i32
  }
  func.func @transform_10(%arg0: i32) -> (i32, i32) {
    %c0_i32 = arith.constant 0 : i32
    %c0_i32_0 = arith.constant 0 : i32
    %c0_i32_1 = arith.constant 0 : i32
    return %c0_i32, %c0_i32_0 : i32, i32
  }
  func.func @transform_11(%arg0: i32) -> (i32, i32) {
    %c0_i32 = arith.constant 0 : i32
    %c0_i32_0 = arith.constant 0 : i32
    %c0_i32_1 = arith.constant 0 : i32
    return %c0_i32, %c0_i32_0 : i32, i32
  }
  func.func @transform_12(%arg0: i32) -> (i32, i32) {
    %c0_i32 = arith.constant 0 : i32
    %c0_i32_0 = arith.constant 0 : i32
    %c0_i32_1 = arith.constant 0 : i32
    return %c0_i32, %c0_i32_0 : i32, i32
  }
  func.func @transform_13(%arg0: i32) -> (i32, i32, i32) {
    %c0_i32 = arith.constant 0 : i32
    %c0_i32_0 = arith.constant 0 : i32
    %c0_i32_1 = arith.constant 0 : i32
    return %arg0, %c0_i32, %c0_i32_0 : i32, i32, i32
  }
}

</mosaic_0001>

<llo_original>
// kernel: tpu_custom_call.1
$region0: #{tpu_custom_call.1}
  #allocation0 [shape = 'u32[]', space=smem, size = 0x4, offset = 0x4, fixed_abs, tag = 'smem constant byte address 0x4 - core index']
  #allocation1 [shape = 'u32[144,128]{1,0:T(1,128)}', space=vmem, size = 0x12000, scoped, tag = 'internal scratch']
  %s0 = inlined_call_operand.hbm [shape: f32[2,1,16], index: 0, kind: input, shape index: {}]
  %s1 = inlined_call_operand.hbm [shape: f32[2,8,32], index: 1, kind: input, shape index: {}]
  %s2 = inlined_call_operand.hbm [shape: f32[32,128], index: 2, kind: input, shape index: {}]
  %s3 = inlined_call_operand.hbm [shape: f32[16,128], index: 3, kind: input, shape index: {}]
  %s4 = inlined_call_operand.vmem [shape: f32[1,128], index: 4, kind: input, shape index: {}]
  %s5 = inlined_call_operand.vmem [shape: f32[1,128], index: 5, kind: input, shape index: {}]
  %s6 = inlined_call_operand.vmem [shape: f32[1,128], index: 6, kind: input, shape index: {}]
  %s7 = inlined_call_operand.hbm [shape: f32[128,128], index: 7, kind: input, shape index: {}]
  %s8 = inlined_call_operand.vmem [shape: f32[1,128], index: 8, kind: input, shape index: {}]
  %s9 = inlined_call_operand.hbm [shape: f32[128,128], index: 9, kind: input, shape index: {}]
  %s10 = inlined_call_operand.vmem [shape: f32[1,128], index: 10, kind: input, shape index: {}]
  %s11 = inlined_call_operand.hbm [shape: f32[128,128], index: 11, kind: input, shape index: {}]
  %s12 = inlined_call_operand.vmem [shape: f32[1,128], index: 12, kind: input, shape index: {}]
  %s13 = inlined_call_operand.hbm [shape: f32[2,8,128], index: 13, kind: output, shape index: {}]
  %s14 = sld [smem:[#allocation0]]
  $region113: #{tpu_custom_call.1} parent=0
    _
  %s16 = ssub.s32 1, %s14
  %s17 = scalar_select 0, %s16, %s14
  $region1: #{tpu_custom_call.1} parent=0
    #allocation2 [shape = 'u8[1024]{0}', space=vmem, size = 0x400, scoped, tag = 'input window, operand 0']
    #allocation3 [shape = 's32[2]{0}', space=sflag, size = 0x8, scoped, tag = 'scoped memory for tpu_custom_call.1']
    #allocation4 [shape = 's32[2]{0}', space=sflag, size = 0x8, scoped, tag = 'scoped memory for tpu_custom_call.1']
    #allocation5 [shape = 'u8[8192]{0}', space=vmem, size = 0x2000, scoped, tag = 'input window, operand 1']
    #allocation6 [shape = 's32[2]{0}', space=sflag, size = 0x8, scoped, tag = 'scoped memory for tpu_custom_call.1']
    #allocation7 [shape = 'u8[16384]{0}', space=vmem, size = 0x4000, scoped, tag = 'input window, operand 2, single buffered']
    #allocation8 [shape = 'u8[8192]{0}', space=vmem, size = 0x2000, scoped, tag = 'input window, operand 3, single buffered']
    #allocation9 [shape = 's32[1]{0}', space=sflag, size = 0x4, scoped, tag = 'scoped memory for tpu_custom_call.1']
    #allocation10 [shape = 'u8[65536]{0}', space=vmem, size = 0x10000, scoped, tag = 'input window, operand 7, single buffered']
    #allocation11 [shape = 'u8[65536]{0}', space=vmem, size = 0x10000, scoped, tag = 'input window, operand 9, single buffered']
    #allocation12 [shape = 's32[1]{0}', space=sflag, size = 0x4, scoped, tag = 'scoped memory for tpu_custom_call.1']
    #allocation13 [shape = 'u8[65536]{0}', space=vmem, size = 0x10000, scoped, tag = 'input window, operand 11, single buffered']
    #allocation14 [shape = 'u8[8192]{0}', space=vmem, size = 0x2000, scoped, tag = 'output window, operand 0']
    %18 = vsyncpa [#allocation3], 0
    %s19 = scalar_lea.sflag [#allocation3], 1
    %20 = vsyncpa %s19, 0
    %21 = vsyncpa [#allocation6], 0
    %s22 = scalar_lea.sflag [#allocation6], 1
    %23 = vsyncpa %s22, 0
    %24 = vsyncpa [#allocation9], 0
    %25 = vsyncpa [#allocation12], 0
    %26 = vsyncpa [#allocation4], 0
    %s27 = scalar_lea.sflag [#allocation4], 1
    %28 = vsyncpa %s27, 0
    loop: start=0, step=1, limit=4
    $region2: #{tpu_custom_call.1} parent=1 // loop_pre_header
      _
    $region3: #{tpu_custom_call.1} parent=1 // loop_header
      %s30 = sphi 0, %s34
      %p31 = scmp.ge.s32.totalorder %s30, 4
      %s40 = sphi 0, %s42
      %s43 = sphi 0, %s40
      %s44 = sphi 0, %s43
      %s60 = sphi 0, %s44
      %s66 = sphi 0, %s68
      %s69 = sphi 0, %s66
      %s70 = sphi 0, %s69
      %s86 = sphi 0, %s70
      %s90 = sphi 0, %s90
      %s92 = sphi 0, %s90
      %s93 = sphi 0, %s92
      %s107 = sphi 0, %s93
      %s111 = sphi 0, %s111
      %s113 = sphi 0, %s111
      %s114 = sphi 0, %s113
      %s128 = sphi 0, %s114
      %s132 = sphi 0, %s132
      %s134 = sphi 0, %s132
      %s135 = sphi 0, %s134
      %s149 = sphi 0, %s135
      %s153 = sphi 0, %s153
      %s155 = sphi 0, %s153
      %s156 = sphi 0, %s155
      %s170 = sphi 0, %s156
      %s174 = sphi 0, %s174
      %s176 = sphi 0, %s174
      %s177 = sphi 0, %s176
      %s191 = sphi 0, %s177
      %s195 = sphi 0, %s195
      %s197 = sphi 0, %s195
      %s198 = sphi 0, %s197
      %s212 = sphi 0, %s198
      %s216 = sphi 0, %s216
      %s218 = sphi 0, %s216
      %s219 = sphi 0, %s218
      %s233 = sphi 0, %s219
      %s237 = sphi 0, %s237
      %s239 = sphi 0, %s237
      %s240 = sphi 0, %s239
      %s254 = sphi 0, %s240
      %s258 = sphi 0, %s258
      %s260 = sphi 0, %s258
      %s261 = sphi 0, %s260
      %s275 = sphi 0, %s261
      %s279 = sphi 0, %s279
      %s281 = sphi 0, %s279
      %s282 = sphi 0, %s281
      %s296 = sphi 0, %s282
      %s300 = sphi 0, %s300
      %s302 = sphi 0, %s300
      %s303 = sphi 0, %s302
      %s317 = sphi 0, %s303
      %s323 = sphi 0, %s325
      %s326 = sphi 0, %s323
      %s327 = sphi 0, %s326
      %s343 = sphi 0, %s327
    $region4: #{tpu_custom_call.1} parent=1 // loop_header_branch
      %33 = sbr.rel (%p31) target = $region8
    $region5: #{tpu_custom_call.1} parent=1 // loop_body
      %s35 = ssub.s32 %s30, 1
      %s36 = ssub.s32 %s30, 2
      %s37 = sadd.s32 %s30, 1
      %s38 = ssub.s32 %s30, %s37
      %p39 = scmp.eq.s32.totalorder %s38, 0
      %s41 = sadd.s32 %s40, 1
      %s42 = scalar_select %p39, %s40, %s41
      %p45 = pneg %p39
      %p46 = scmp.eq.s32.totalorder %s30, 1
      %p47 = por %p45, %p46
      %p48 = scmp.ne.s32.totalorder %s40, %s43
      %p49 = scmp.eq.s32.totalorder %s30, 0
      %p50 = por %p48, %p49
      %p51 = scmp.ne.s32.totalorder %s40, %s43
      %p52 = scmp.eq.s32.totalorder %s35, 1
      %p53 = por %p51, %p52
      %p54 = scmp.ne.s32.totalorder %s43, %s44
      %p55 = scmp.eq.s32.totalorder %s35, 0
      %p56 = por %p54, %p55
      %p57 = scmp.ne.s32.totalorder %s43, %s44
      %p58 = scmp.eq.s32.totalorder %s36, 1
      %p59 = por %p57, %p58
      %p61 = scmp.ne.s32.totalorder %s44, %s60
      %p62 = scmp.eq.s32.totalorder %s36, 0
      %p63 = por %p61, %p62
      %s64 = ssub.s32 %s30, %s37
      %p65 = scmp.eq.s32.totalorder %s64, 0
      %s67 = sadd.s32 %s66, 1
      %s68 = scalar_select %p65, %s66, %s67
      %p71 = pneg %p65
      %p72 = scmp.eq.s32.totalorder %s30, 1
      %p73 = por %p71, %p72
      %p74 = scmp.ne.s32.totalorder %s66, %s69
      %p75 = scmp.eq.s32.totalorder %s30, 0
      %p76 = por %p74, %p75
      %p77 = scmp.ne.s32.totalorder %s66, %s69
      %p78 = scmp.eq.s32.totalorder %s35, 1
      %p79 = por %p77, %p78
      %p80 = scmp.ne.s32.totalorder %s69, %s70
      %p81 = scmp.eq.s32.totalorder %s35, 0
      %p82 = por %p80, %p81
      %p83 = scmp.ne.s32.totalorder %s69, %s70
      %p84 = scmp.eq.s32.totalorder %s36, 1
      %p85 = por %p83, %p84
      %p87 = scmp.ne.s32.totalorder %s70, %s86
      %p88 = scmp.eq.s32.totalorder %s36, 0
      %p89 = por %p87, %p88
      %s91 = sadd.s32 %s90, 1
      %p94 = scmp.eq.s32.totalorder %s30, 1
      %p95 = scmp.ne.s32.totalorder %s90, %s92
      %p96 = scmp.eq.s32.totalorder %s30, 0
      %p97 = por %p95, %p96
      %p98 = scmp.ne.s32.totalorder %s90, %s92
      %p99 = scmp.eq.s32.totalorder %s35, 1
      %p100 = por %p98, %p99
      %p101 = scmp.ne.s32.totalorder %s92, %s93
      %p102 = scmp.eq.s32.totalorder %s35, 0
      %p103 = por %p101, %p102
      %p104 = scmp.ne.s32.totalorder %s92, %s93
      %p105 = scmp.eq.s32.totalorder %s36, 1
      %p106 = por %p104, %p105
      %p108 = scmp.ne.s32.totalorder %s93, %s107
      %p109 = scmp.eq.s32.totalorder %s36, 0
      %p110 = por %p108, %p109
      %s112 = sadd.s32 %s111, 1
      %p115 = scmp.eq.s32.totalorder %s30, 1
      %p116 = scmp.ne.s32.totalorder %s111, %s113
      %p117 = scmp.eq.s32.totalorder %s30, 0
      %p118 = por %p116, %p117
      %p119 = scmp.ne.s32.totalorder %s111, %s113
      %p120 = scmp.eq.s32.totalorder %s35, 1
      %p121 = por %p119, %p120
      %p122 = scmp.ne.s32.totalorder %s113, %s114
      %p123 = scmp.eq.s32.totalorder %s35, 0
      %p124 = por %p122, %p123
      %p125 = scmp.ne.s32.totalorder %s113, %s114
      %p126 = scmp.eq.s32.totalorder %s36, 1
      %p127 = por %p125, %p126
      %p129 = scmp.ne.s32.totalorder %s114, %s128
      %p130 = scmp.eq.s32.totalorder %s36, 0
      %p131 = por %p129, %p130
      %s133 = sadd.s32 %s132, 1
      %p136 = scmp.eq.s32.totalorder %s30, 1
      %p137 = scmp.ne.s32.totalorder %s132, %s134
      %p138 = scmp.eq.s32.totalorder %s30, 0
      %p139 = por %p137, %p138
      %p140 = scmp.ne.s32.totalorder %s132, %s134
      %p141 = scmp.eq.s32.totalorder %s35, 1
      %p142 = por %p140, %p141
      %p143 = scmp.ne.s32.totalorder %s134, %s135
      %p144 = scmp.eq.s32.totalorder %s35, 0
      %p145 = por %p143, %p144
      %p146 = scmp.ne.s32.totalorder %s134, %s135
      %p147 = scmp.eq.s32.totalorder %s36, 1
      %p148 = por %p146, %p147
      %p150 = scmp.ne.s32.totalorder %s135, %s149
      %p151 = scmp.eq.s32.totalorder %s36, 0
      %p152 = por %p150, %p151
      %s154 = sadd.s32 %s153, 1
      %p157 = scmp.eq.s32.totalorder %s30, 1
      %p158 = scmp.ne.s32.totalorder %s153, %s155
      %p159 = scmp.eq.s32.totalorder %s30, 0
      %p160 = por %p158, %p159
      %p161 = scmp.ne.s32.totalorder %s153, %s155
      %p162 = scmp.eq.s32.totalorder %s35, 1
      %p163 = por %p161, %p162
      %p164 = scmp.ne.s32.totalorder %s155, %s156
      %p165 = scmp.eq.s32.totalorder %s35, 0
      %p166 = por %p164, %p165
      %p167 = scmp.ne.s32.totalorder %s155, %s156
      %p168 = scmp.eq.s32.totalorder %s36, 1
      %p169 = por %p167, %p168
      %p171 = scmp.ne.s32.totalorder %s156, %s170
      %p172 = scmp.eq.s32.totalorder %s36, 0
      %p173 = por %p171, %p172
      %s175 = sadd.s32 %s174, 1
      %p178 = scmp.eq.s32.totalorder %s30, 1
      %p179 = scmp.ne.s32.totalorder %s174, %s176
      %p180 = scmp.eq.s32.totalorder %s30, 0
      %p181 = por %p179, %p180
      %p182 = scmp.ne.s32.totalorder %s174, %s176
      %p183 = scmp.eq.s32.totalorder %s35, 1
      %p184 = por %p182, %p183
      %p185 = scmp.ne.s32.totalorder %s176, %s177
      %p186 = scmp.eq.s32.totalorder %s35, 0
      %p187 = por %p185, %p186
      %p188 = scmp.ne.s32.totalorder %s176, %s177
      %p189 = scmp.eq.s32.totalorder %s36, 1
      %p190 = por %p188, %p189
      %p192 = scmp.ne.s32.totalorder %s177, %s191
      %p193 = scmp.eq.s32.totalorder %s36, 0
      %p194 = por %p192, %p193
      %s196 = sadd.s32 %s195, 1
      %p199 = scmp.eq.s32.totalorder %s30, 1
      %p200 = scmp.ne.s32.totalorder %s195, %s197
      %p201 = scmp.eq.s32.totalorder %s30, 0
      %p202 = por %p200, %p201
      %p203 = scmp.ne.s32.totalorder %s195, %s197
      %p204 = scmp.eq.s32.totalorder %s35, 1
      %p205 = por %p203, %p204
      %p206 = scmp.ne.s32.totalorder %s197, %s198
      %p207 = scmp.eq.s32.totalorder %s35, 0
      %p208 = por %p206, %p207
      %p209 = scmp.ne.s32.totalorder %s197, %s198
      %p210 = scmp.eq.s32.totalorder %s36, 1
      %p211 = por %p209, %p210
      %p213 = scmp.ne.s32.totalorder %s198, %s212
      %p214 = scmp.eq.s32.totalorder %s36, 0
      %p215 = por %p213, %p214
      %s217 = sadd.s32 %s216, 1
      %p220 = scmp.eq.s32.totalorder %s30, 1
      %p221 = scmp.ne.s32.totalorder %s216, %s218
      %p222 = scmp.eq.s32.totalorder %s30, 0
      %p223 = por %p221, %p222
      %p224 = scmp.ne.s32.totalorder %s216, %s218
      %p225 = scmp.eq.s32.totalorder %s35, 1
      %p226 = por %p224, %p225
      %p227 = scmp.ne.s32.totalorder %s218, %s219
      %p228 = scmp.eq.s32.totalorder %s35, 0
      %p229 = por %p227, %p228
      %p230 = scmp.ne.s32.totalorder %s218, %s219
      %p231 = scmp.eq.s32.totalorder %s36, 1
      %p232 = por %p230, %p231
      %p234 = scmp.ne.s32.totalorder %s219, %s233
      %p235 = scmp.eq.s32.totalorder %s36, 0
      %p236 = por %p234, %p235
      %s238 = sadd.s32 %s237, 1
      %p241 = scmp.eq.s32.totalorder %s30, 1
      %p242 = scmp.ne.s32.totalorder %s237, %s239
      %p243 = scmp.eq.s32.totalorder %s30, 0
      %p244 = por %p242, %p243
      %p245 = scmp.ne.s32.totalorder %s237, %s239
      %p246 = scmp.eq.s32.totalorder %s35, 1
      %p247 = por %p245, %p246
      %p248 = scmp.ne.s32.totalorder %s239, %s240
      %p249 = scmp.eq.s32.totalorder %s35, 0
      %p250 = por %p248, %p249
      %p251 = scmp.ne.s32.totalorder %s239, %s240
      %p252 = scmp.eq.s32.totalorder %s36, 1
      %p253 = por %p251, %p252
      %p255 = scmp.ne.s32.totalorder %s240, %s254
      %p256 = scmp.eq.s32.totalorder %s36, 0
      %p257 = por %p255, %p256
      %s259 = sadd.s32 %s258, 1
      %p262 = scmp.eq.s32.totalorder %s30, 1
      %p263 = scmp.ne.s32.totalorder %s258, %s260
      %p264 = scmp.eq.s32.totalorder %s30, 0
      %p265 = por %p263, %p264
      %p266 = scmp.ne.s32.totalorder %s258, %s260
      %p267 = scmp.eq.s32.totalorder %s35, 1
      %p268 = por %p266, %p267
      %p269 = scmp.ne.s32.totalorder %s260, %s261
      %p270 = scmp.eq.s32.totalorder %s35, 0
      %p271 = por %p269, %p270
      %p272 = scmp.ne.s32.totalorder %s260, %s261
      %p273 = scmp.eq.s32.totalorder %s36, 1
      %p274 = por %p272, %p273
      %p276 = scmp.ne.s32.totalorder %s261, %s275
      %p277 = scmp.eq.s32.totalorder %s36, 0
      %p278 = por %p276, %p277
      %s280 = sadd.s32 %s279, 1
      %p283 = scmp.eq.s32.totalorder %s30, 1
      %p284 = scmp.ne.s32.totalorder %s279, %s281
      %p285 = scmp.eq.s32.totalorder %s30, 0
      %p286 = por %p284, %p285
      %p287 = scmp.ne.s32.totalorder %s279, %s281
      %p288 = scmp.eq.s32.totalorder %s35, 1
      %p289 = por %p287, %p288
      %p290 = scmp.ne.s32.totalorder %s281, %s282
      %p291 = scmp.eq.s32.totalorder %s35, 0
      %p292 = por %p290, %p291
      %p293 = scmp.ne.s32.totalorder %s281, %s282
      %p294 = scmp.eq.s32.totalorder %s36, 1
      %p295 = por %p293, %p294
      %p297 = scmp.ne.s32.totalorder %s282, %s296
      %p298 = scmp.eq.s32.totalorder %s36, 0
      %p299 = por %p297, %p298
      %s301 = sadd.s32 %s300, 1
      %p304 = scmp.eq.s32.totalorder %s30, 1
      %p305 = scmp.ne.s32.totalorder %s300, %s302
      %p306 = scmp.eq.s32.totalorder %s30, 0
      %p307 = por %p305, %p306
      %p308 = scmp.ne.s32.totalorder %s300, %s302
      %p309 = scmp.eq.s32.totalorder %s35, 1
      %p310 = por %p308, %p309
      %p311 = scmp.ne.s32.totalorder %s302, %s303
      %p312 = scmp.eq.s32.totalorder %s35, 0
      %p313 = por %p311, %p312
      %p314 = scmp.ne.s32.totalorder %s302, %s303
      %p315 = scmp.eq.s32.totalorder %s36, 1
      %p316 = por %p314, %p315
      %p318 = scmp.ne.s32.totalorder %s303, %s317
      %p319 = scmp.eq.s32.totalorder %s36, 0
      %p320 = por %p318, %p319
      %s321 = ssub.s32 %s30, %s37
      %p322 = scmp.eq.s32.totalorder %s321, 0
      %s324 = sadd.s32 %s323, 1
      %s325 = scalar_select %p322, %s323, %s324
      %p328 = pneg %p322
      %p329 = scmp.eq.s32.totalorder %s30, 1
      %p330 = por %p328, %p329
      %p331 = scmp.ne.s32.totalorder %s323, %s326
      %p332 = scmp.eq.s32.totalorder %s30, 0
      %p333 = por %p331, %p332
      %p334 = scmp.ne.s32.totalorder %s323, %s326
      %p335 = scmp.eq.s32.totalorder %s35, 1
      %p336 = por %p334, %p335
      %p337 = scmp.ne.s32.totalorder %s326, %s327
      %p338 = scmp.eq.s32.totalorder %s35, 0
      %p339 = por %p337, %p338
      %p340 = scmp.ne.s32.totalorder %s326, %s327
      %p341 = scmp.eq.s32.totalorder %s36, 1
      %p342 = por %p340, %p341
      %p344 = scmp.ne.s32.totalorder %s327, %s343
      %p345 = scmp.eq.s32.totalorder %s36, 0
      %p346 = por %p344, %p345
      %p347 = scmp.le.s32.totalorder 1, %s30
      %p348 = scmp.lt.s32.totalorder %s30, 3
      %p349 = pnand %p347, %p348
      %p350 = pneg %p349
      // Predicated region
      $region9: #{tpu_custom_call.1} parent=5 // pred_check
        _
      $region10: #{tpu_custom_call.1} parent=5 // pred_check_branch
        %352 = sbr.rel (%p349) target = $region12
      $region11: #{tpu_custom_call.1} parent=5 // pred_region
        %s353 = ssub.s32 %s30, 1
        // Predicated region
        $region13: #{tpu_custom_call.1} parent=11 // pred_check
          %p354 = pneg %p103
        $region14: #{tpu_custom_call.1} parent=11 // pred_check_branch
          %356 = sbr.rel (%p354) target = $region16
        $region15: #{tpu_custom_call.1} parent=11 // pred_region
          %s358 = ssub.s32 512, 512
          %359 = vsyncadd [#allocation6], %s358
          %s360 = sshll.u32 [#allocation7], 4
          %s361 = int_to_ptr.vmem [resolvable:$true] %s360
          %366 = dma.hbm_to_vmem [thread:$0]  %s2, 512, %s361, [#allocation6], 128, 128, 8
        $region16: #{tpu_custom_call.1} parent=11 // pred_fallthru
          _
        // Predicated region
        $region17: #{tpu_custom_call.1} parent=11 // pred_check
          %p367 = pneg %p124
        $region18: #{tpu_custom_call.1} parent=11 // pred_check_branch
          %369 = sbr.rel (%p367) target = $region20
        $region19: #{tpu_custom_call.1} parent=11 // pred_region
          %s371 = ssub.s32 256, 256
          %372 = vsyncadd [#allocation9], %s371
          %s373 = sshll.u32 [#allocation8], 4
          %s374 = int_to_ptr.vmem [resolvable:$true] %s373
          %379 = dma.hbm_to_vmem [thread:$0]  %s3, 256, %s374, [#allocation9], 128, 128, 8
        $region20: #{tpu_custom_call.1} parent=11 // pred_fallthru
          _
        // Predicated region
        $region21: #{tpu_custom_call.1} parent=11 // pred_check
          %p380 = pneg %p145
        $region22: #{tpu_custom_call.1} parent=11 // pred_check_branch
          %382 = sbr.rel (%p380) target = $region24
        $region23: #{tpu_custom_call.1} parent=11 // pred_region
          _
        $region24: #{tpu_custom_call.1} parent=11 // pred_fallthru
          _
        // Predicated region
        $region25: #{tpu_custom_call.1} parent=11 // pred_check
          %p383 = pneg %p166
        $region26: #{tpu_custom_call.1} parent=11 // pred_check_branch
          %385 = sbr.rel (%p383) target = $region28
        $region27: #{tpu_custom_call.1} parent=11 // pred_region
          _
        $region28: #{tpu_custom_call.1} parent=11 // pred_fallthru
          _
        // Predicated region
        $region29: #{tpu_custom_call.1} parent=11 // pred_check
          %p386 = pneg %p187
        $region30: #{tpu_custom_call.1} parent=11 // pred_check_branch
          %388 = sbr.rel (%p386) target = $region32
        $region31: #{tpu_custom_call.1} parent=11 // pred_region
          _
        $region32: #{tpu_custom_call.1} parent=11 // pred_fallthru
          _
        // Predicated region
        $region33: #{tpu_custom_call.1} parent=11 // pred_check
          %p389 = pneg %p208
        $region34: #{tpu_custom_call.1} parent=11 // pred_check_branch
          %391 = sbr.rel (%p389) target = $region36
        $region35: #{tpu_custom_call.1} parent=11 // pred_region
          %s393 = ssub.s32 2048, 2048
          %394 = vsyncadd [#allocation9], %s393
          %s395 = sshll.u32 [#allocation10], 4
          %s396 = int_to_ptr.vmem [resolvable:$true] %s395
          %401 = dma.hbm_to_vmem [thread:$0]  %s7, 2048, %s396, [#allocation9], 128, 128, 8
        $region36: #{tpu_custom_call.1} parent=11 // pred_fallthru
          _
        // Predicated region
        $region37: #{tpu_custom_call.1} parent=11 // pred_check
          %p402 = pneg %p229
        $region38: #{tpu_custom_call.1} parent=11 // pred_check_branch
          %404 = sbr.rel (%p402) target = $region40
        $region39: #{tpu_custom_call.1} parent=11 // pred_region
          _
        $region40: #{tpu_custom_call.1} parent=11 // pred_fallthru
          _
        // Predicated region
        $region41: #{tpu_custom_call.1} parent=11 // pred_check
          %p405 = pneg %p250
        $region42: #{tpu_custom_call.1} parent=11 // pred_check_branch
          %407 = sbr.rel (%p405) target = $region44
        $region43: #{tpu_custom_call.1} parent=11 // pred_region
          %s409 = ssub.s32 2048, 2048
          %410 = vsyncadd [#allocation12], %s409
          %s411 = sshll.u32 [#allocation11], 4
          %s412 = int_to_ptr.vmem [resolvable:$true] %s411
          %417 = dma.hbm_to_vmem [thread:$0]  %s9, 2048, %s412, [#allocation12], 128, 128, 8
        $region44: #{tpu_custom_call.1} parent=11 // pred_fallthru
          _
        // Predicated region
        $region45: #{tpu_custom_call.1} parent=11 // pred_check
          %p418 = pneg %p271
        $region46: #{tpu_custom_call.1} parent=11 // pred_check_branch
          %420 = sbr.rel (%p418) target = $region48
        $region47: #{tpu_custom_call.1} parent=11 // pred_region
          _
        $region48: #{tpu_custom_call.1} parent=11 // pred_fallthru
          _
        // Predicated region
        $region49: #{tpu_custom_call.1} parent=11 // pred_check
          %p421 = pneg %p292
        $region50: #{tpu_custom_call.1} parent=11 // pred_check_branch
          %423 = sbr.rel (%p421) target = $region52
        $region51: #{tpu_custom_call.1} parent=11 // pred_region
          %s425 = ssub.s32 2048, 2048
          %426 = vsyncadd [#allocation12], %s425
          %s427 = sshll.u32 [#allocation13], 4
          %s428 = int_to_ptr.vmem [resolvable:$true] %s427
          %433 = dma.hbm_to_vmem [thread:$0]  %s11, 2048, %s428, [#allocation12], 128, 128, 8
        $region52: #{tpu_custom_call.1} parent=11 // pred_fallthru
          _
        // Predicated region
        $region53: #{tpu_custom_call.1} parent=11 // pred_check
          %p434 = pneg %p313
        $region54: #{tpu_custom_call.1} parent=11 // pred_check_branch
          %436 = sbr.rel (%p434) target = $region56
        $region55: #{tpu_custom_call.1} parent=11 // pred_region
          _
        $region56: #{tpu_custom_call.1} parent=11 // pred_fallthru
          _
      $region12: #{tpu_custom_call.1} parent=5 // pred_fallthru
        _
      %p437 = scmp.lt.s32.totalorder %s30, 2
      // Predicated region
      $region57: #{tpu_custom_call.1} parent=5 // pred_check
        %p438 = pneg %p437
      $region58: #{tpu_custom_call.1} parent=5 // pred_check_branch
        %440 = sbr.rel (%p438) target = $region60
      $region59: #{tpu_custom_call.1} parent=5 // pred_region
        // Predicated region
        $region61: #{tpu_custom_call.1} parent=59 // pred_check
          %p441 = pneg %p50
        $region62: #{tpu_custom_call.1} parent=59 // pred_check_branch
          %443 = sbr.rel (%p441) target = $region64
        $region63: #{tpu_custom_call.1} parent=59 // pred_region
          %s444 = sand.u32 %s40, 1
          %s445 = scalar_lea.sflag [#allocation3], %s444
          %s446 = sand.u32 %s40, 1
          %s447 = scalar_lea.vmem [#allocation2], %s446
          %s449 = ssub.s32 16, 16
          %450 = vsyncadd %s445, %s449
          %s451 = smul.addr %s30, 16
          %s452 = scalar_lea.hbm %s0, %s451
          %s454 = sshll.u32 %s447, 4
          %s455 = int_to_ptr.vmem [resolvable:$true] %s454
          %457 = dma.hbm_to_vmem [thread:$0]  %s452, 16, %s455, %s445
        $region64: #{tpu_custom_call.1} parent=59 // pred_fallthru
          _
        // Predicated region
        $region65: #{tpu_custom_call.1} parent=59 // pred_check
          %p458 = pneg %p76
        $region66: #{tpu_custom_call.1} parent=59 // pred_check_branch
          %460 = sbr.rel (%p458) target = $region68
        $region67: #{tpu_custom_call.1} parent=59 // pred_region
          %s461 = sand.u32 %s30, 1
          %s462 = scalar_lea.sflag [#allocation6], %s461
          %s463 = sand.u32 %s66, 1
          %s464 = smul.addr %s463, 8
          %s465 = scalar_lea.vmem [#allocation5], %s464
          %s467 = ssub.s32 128, 128
          %468 = vsyncadd %s462, %s467
          %s469 = smul.addr %s30, 128
          %s470 = scalar_lea.hbm %s1, %s469
          %s472 = sshll.u32 %s465, 4
          %s473 = int_to_ptr.vmem [resolvable:$true] %s472
          %475 = dma.hbm_to_vmem [thread:$0]  %s470, 128, %s473, %s462
        $region68: #{tpu_custom_call.1} parent=59 // pred_fallthru
          _
      $region60: #{tpu_custom_call.1} parent=5 // pred_fallthru
        _
      %p476 = scmp.le.s32.totalorder 1, %s30
      %p477 = scmp.lt.s32.totalorder %s30, 3
      %p478 = pnand %p476, %p477
      %p479 = pneg %p478
      // Predicated region
      $region69: #{tpu_custom_call.1} parent=5 // pred_check
        _
      $region70: #{tpu_custom_call.1} parent=5 // pred_check_branch
        %481 = sbr.rel (%p478) target = $region72
      $region71: #{tpu_custom_call.1} parent=5 // pred_region
        %s482 = ssub.s32 %s30, 1
        %s483 = sand.u32 %s43, 1
        %s484 = scalar_lea.sflag [#allocation3], %s483
        %s485 = sand.u32 %s43, 1
        %s486 = scalar_lea.vmem [#allocation2], %s485
        // Predicated region
        $region73: #{tpu_custom_call.1} parent=71 // pred_check
          %p487 = pneg %p56
        $region74: #{tpu_custom_call.1} parent=71 // pred_check_branch
          %489 = sbr.rel (%p487) target = $region76
        $region75: #{tpu_custom_call.1} parent=71 // pred_region
          %490 = dma.done %s484, 16
        $region76: #{tpu_custom_call.1} parent=71 // pred_fallthru
          _
        %s491 = sand.u32 %s35, 1
        %s492 = scalar_lea.sflag [#allocation6], %s491
        %s493 = sand.u32 %s69, 1
        %s494 = smul.addr %s493, 8
        %s495 = scalar_lea.vmem [#allocation5], %s494
        // Predicated region
        $region77: #{tpu_custom_call.1} parent=71 // pred_check
          %p496 = pneg %p82
        $region78: #{tpu_custom_call.1} parent=71 // pred_check_branch
          %498 = sbr.rel (%p496) target = $region80
        $region79: #{tpu_custom_call.1} parent=71 // pred_region
          %499 = dma.done %s492, 128
        $region80: #{tpu_custom_call.1} parent=71 // pred_fallthru
          _
        // Predicated region
        $region81: #{tpu_custom_call.1} parent=71 // pred_check
          %p500 = pneg %p103
        $region82: #{tpu_custom_call.1} parent=71 // pred_check_branch
          %502 = sbr.rel (%p500) target = $region84
        $region83: #{tpu_custom_call.1} parent=71 // pred_region
          %503 = dma.done [#allocation6], 512
        $region84: #{tpu_custom_call.1} parent=71 // pred_fallthru
          _
        // Predicated region
        $region85: #{tpu_custom_call.1} parent=71 // pred_check
          %p504 = pneg %p124
        $region86: #{tpu_custom_call.1} parent=71 // pred_check_branch
          %506 = sbr.rel (%p504) target = $region88
        $region87: #{tpu_custom_call.1} parent=71 // pred_region
          %507 = dma.done [#allocation9], 256
        $region88: #{tpu_custom_call.1} parent=71 // pred_fallthru
          _
        // Predicated region
        $region89: #{tpu_custom_call.1} parent=71 // pred_check
          %p508 = pneg %p208
        $region90: #{tpu_custom_call.1} parent=71 // pred_check_branch
          %510 = sbr.rel (%p508) target = $region92
        $region91: #{tpu_custom_call.1} parent=71 // pred_region
          %511 = dma.done [#allocation9], 2048
        $region92: #{tpu_custom_call.1} parent=71 // pred_fallthru
          _
        // Predicated region
        $region93: #{tpu_custom_call.1} parent=71 // pred_check
          %p512 = pneg %p250
        $region94: #{tpu_custom_call.1} parent=71 // pred_check_branch
          %514 = sbr.rel (%p512) target = $region96
        $region95: #{tpu_custom_call.1} parent=71 // pred_region
          %515 = dma.done [#allocation12], 2048
        $region96: #{tpu_custom_call.1} parent=71 // pred_fallthru
          _
        // Predicated region
        $region97: #{tpu_custom_call.1} parent=71 // pred_check
          %p516 = pneg %p292
        $region98: #{tpu_custom_call.1} parent=71 // pred_check_branch
          %518 = sbr.rel (%p516) target = $region100
        $region99: #{tpu_custom_call.1} parent=71 // pred_region
          %519 = dma.done [#allocation12], 2048
        $region100: #{tpu_custom_call.1} parent=71 // pred_fallthru
          _
        %s520 = sand.u32 %s43, 1
        %s521 = scalar_lea.sflag [#allocation3], %s520
        %s522 = sand.u32 %s43, 1
        %s523 = scalar_lea.vmem [#allocation2], %s522
        %p524 = pneg %p56
        %p525 = pneg %p53
        %s526 = sand.u32 %s35, 1
        %s527 = scalar_lea.sflag [#allocation6], %s526
        %s528 = sand.u32 %s69, 1
        %s529 = smul.addr %s528, 8
        %s530 = scalar_lea.vmem [#allocation5], %s529
        %p531 = pneg %p82
        %p532 = pneg %p79
        %p533 = pneg %p103
        %p534 = pneg %p100
        %p535 = pneg %p124
        %p536 = pneg %p121
        %p537 = pneg %p145
        %p538 = pneg %p142
        %p539 = pneg %p166
        %p540 = pneg %p163
        %p541 = pneg %p187
        %p542 = pneg %p184
        %p543 = pneg %p208
        %p544 = pneg %p205
        %p545 = pneg %p229
        %p546 = pneg %p226
        %p547 = pneg %p250
        %p548 = pneg %p247
        %p549 = pneg %p271
        %p550 = pneg %p268
        %p551 = pneg %p292
        %p552 = pneg %p289
        %p553 = pneg %p313
        %p554 = pneg %p310
        %p555 = pneg %p339
        %p556 = pneg %p336
        %s557 = sand.u32 %s326, 1
        %s558 = scalar_lea.sflag [#allocation4], %s557
        %s559 = sand.u32 %s326, 1
        %s560 = smul.addr %s559, 8
        %s561 = scalar_lea.vmem [#allocation14], %s560
        %v562 = vld [vmem:[%s495] sm:$0xff]
        %v563 = vld [vmem:[%s486] sm:$0x1]
        %v564 = vld [vmem:[#allocation8] sm:$0xff]
        %v565 = vld [vmem:[#allocation8 + $0x8] sm:$0xff]
        %v566 = vld [vmem:[%s4] sm:$0x1]
        %vm567 = vcmask 130048
        %v569 = vsel %vm567, %v563, 0
        %571 = vmatprep.subr.mxu0 0.0
        %572 = vmatpush1.msra.mxu0 %v564
        %573 = vmatprep.subr.mxu0 0.0
        %574 = vmatpush1.msra.mxu0 %v565
        %575 = vmatprep.subr.mxu0 0.0
        %576 = vmatpush1.msra.mxu0 0.0
        %577 = vmatprep.subr.mxu0 0.0
        %578 = vmatpush1.msra.mxu0 0.0
        %579 = vmatprep.subr.mxu0 0.0
        %580 = vmatpush1.msra.mxu0 0.0
        %581 = vmatprep.subr.mxu0 0.0
        %582 = vmatpush1.msra.mxu0 0.0
        %583 = vmatprep.subr.mxu0 0.0
        %584 = vmatpush1.msra.mxu0 0.0
        %585 = vmatprep.subr.mxu0 0.0
        %586 = vmatpush1.msra.mxu0 0.0
        %587 = vmatprep.subr.mxu0 0.0
        %588 = vmatpush1.msra.mxu0 0.0
        %589 = vmatprep.subr.mxu0 0.0
        %590 = vmatpush1.msra.mxu0 0.0
        %591 = vmatprep.subr.mxu0 0.0
        %592 = vmatpush1.msra.mxu0 0.0
        %593 = vmatprep.subr.mxu0 0.0
        %594 = vmatpush1.msra.mxu0 0.0
        %595 = vmatprep.subr.mxu0 0.0
        %596 = vmatpush1.msra.mxu0 0.0
        %597 = vmatprep.subr.mxu0 0.0
        %598 = vmatpush1.msra.mxu0 0.0
        %599 = vmatprep.subr.mxu0 0.0
        %600 = vmatpush1.msra.mxu0 0.0
        %601 = vmatprep.subr.mxu0 0.0
        %602 = vmatpush1.msra.mxu0 0.0
        %603 = vmatprep.subr.mxu0 0.0
        %604 = vmatpush1.msra.mxu0 0.0
        %605 = vmatprep.subr.mxu0 0.0
        %606 = vmatpush1.msra.mxu0 0.0
        %607 = vmatprep.subr.mxu0 0.0
        %608 = vmatpush1.msra.mxu0 0.0
        %609 = vmatprep.subr.mxu0 0.0
        %610 = vmatpush1.msra.mxu0 0.0
        %611 = vmatprep.subr.mxu0 0.0
        %612 = vmatpush1.msra.mxu0 0.0
        %613 = vmatprep.subr.mxu0 0.0
        %614 = vmatpush1.msra.mxu0 0.0
        %615 = vmatprep.subr.mxu0 0.0
        %616 = vmatpush1.msra.mxu0 0.0
        %617 = vmatprep.subr.mxu0 0.0
        %618 = vmatpush1.msra.mxu0 0.0
        %619 = vmatprep.subr.mxu0 0.0
        %620 = vmatpush1.msra.mxu0 0.0
        %621 = vmatprep.subr.mxu0 0.0
        %622 = vmatpush1.msra.mxu0 0.0
        %623 = vmatprep.subr.mxu0 0.0
        %624 = vmatpush1.msra.mxu0 0.0
        %625 = vmatprep.subr.mxu0 0.0
        %626 = vmatpush1.msra.mxu0 0.0
        %627 = vmatprep.subr.mxu0 0.0
        %628 = vmatpush1.msra.mxu0 0.0
        %629 = vmatprep.subr.mxu0 0.0
        %630 = vmatpush1.msra.mxu0 0.0
        %631 = vmatprep.subr.mxu0 0.0
        %632 = vmatpush1.msra.mxu0 0.0
        %633 = vmatprep.subr.mxu0 0.0
        %634 = vmatpush1.msra.mxu0 0.0
        %635 = vmatprep.mubr.f32.mxu0 0.0
        %636 = vmatmul.mubr.f32.gmra.mrb[0].mxu0 %v569
        %v637 = vpop.f32.mrb[0].mxu0
        %v638 = vadd.f32 %v566, %v637
        %v639 = vpop.f32.mrb[0].mxu0
        %640 = vdwg.mxu0
        %v641 = vld [vmem:[#allocation7] sm:$0xff]
        %v642 = vld [vmem:[#allocation7 + $0x8] sm:$0xff]
        %v643 = vld [vmem:[#allocation7 + $0x10] sm:$0xff]
        %v644 = vld [vmem:[#allocation7 + $0x18] sm:$0xff]
        %vm645 = vcmask 261120
        %v647 = vsel %vm645, %v562, 0
        %649 = vmatprep.subr.mxu0 0.0
        %650 = vmatpush1.msra.mxu0 %v641
        %651 = vmatprep.subr.mxu0 0.0
        %652 = vmatpush1.msra.mxu0 %v642
        %653 = vmatprep.subr.mxu0 0.0
        %654 = vmatpush1.msra.mxu0 %v643
        %655 = vmatprep.subr.mxu0 0.0
        %656 = vmatpush1.msra.mxu0 %v644
        %657 = vmatprep.subr.mxu0 0.0
        %658 = vmatpush1.msra.mxu0 0.0
        %659 = vmatprep.subr.mxu0 0.0
        %660 = vmatpush1.msra.mxu0 0.0
        %661 = vmatprep.subr.mxu0 0.0
        %662 = vmatpush1.msra.mxu0 0.0
        %663 = vmatprep.subr.mxu0 0.0
        %664 = vmatpush1.msra.mxu0 0.0
        %665 = vmatprep.subr.mxu0 0.0
        %666 = vmatpush1.msra.mxu0 0.0
        %667 = vmatprep.subr.mxu0 0.0
        %668 = vmatpush1.msra.mxu0 0.0
        %669 = vmatprep.subr.mxu0 0.0
        %670 = vmatpush1.msra.mxu0 0.0
        %671 = vmatprep.subr.mxu0 0.0
        %672 = vmatpush1.msra.mxu0 0.0
        %673 = vmatprep.subr.mxu0 0.0
        %674 = vmatpush1.msra.mxu0 0.0
        %675 = vmatprep.subr.mxu0 0.0
        %676 = vmatpush1.msra.mxu0 0.0
        %677 = vmatprep.subr.mxu0 0.0
        %678 = vmatpush1.msra.mxu0 0.0
        %679 = vmatprep.subr.mxu0 0.0
        %680 = vmatpush1.msra.mxu0 0.0
        %681 = vmatprep.subr.mxu0 0.0
        %682 = vmatpush1.msra.mxu0 0.0
        %683 = vmatprep.subr.mxu0 0.0
        %684 = vmatpush1.msra.mxu0 0.0
        %685 = vmatprep.subr.mxu0 0.0
        %686 = vmatpush1.msra.mxu0 0.0
        %687 = vmatprep.subr.mxu0 0.0
        %688 = vmatpush1.msra.mxu0 0.0
        %689 = vmatprep.subr.mxu0 0.0
        %690 = vmatpush1.msra.mxu0 0.0
        %691 = vmatprep.subr.mxu0 0.0
        %692 = vmatpush1.msra.mxu0 0.0
        %693 = vmatprep.subr.mxu0 0.0
        %694 = vmatpush1.msra.mxu0 0.0
        %695 = vmatprep.subr.mxu0 0.0
        %696 = vmatpush1.msra.mxu0 0.0
        %697 = vmatprep.subr.mxu0 0.0
        %698 = vmatpush1.msra.mxu0 0.0
        %699 = vmatprep.subr.mxu0 0.0
        %700 = vmatpush1.msra.mxu0 0.0
        %701 = vmatprep.subr.mxu0 0.0
        %702 = vmatpush1.msra.mxu0 0.0
        %703 = vmatprep.subr.mxu0 0.0
        %704 = vmatpush1.msra.mxu0 0.0
        %705 = vmatprep.subr.mxu0 0.0
        %706 = vmatpush1.msra.mxu0 0.0
        %707 = vmatprep.subr.mxu0 0.0
        %708 = vmatpush1.msra.mxu0 0.0
        %709 = vmatprep.subr.mxu0 0.0
        %710 = vmatpush1.msra.mxu0 0.0
        %711 = vmatprep.subr.mxu0 0.0
        %712 = vmatpush1.msra.mxu0 0.0
        %713 = vmatprep.mubr.f32.mxu0 0.0
        %714 = vmatmul.mubr.f32.gmra.mrb[0].mxu0 %v647
        %v715 = vpop.f32.mrb[0].mxu0
        %v716 = vadd.f32 0.0, %v715
        %v717 = vpop.f32.mrb[0].mxu0
        %718 = vdwg.mxu0
        %v719 = vlaneseq
        %v720 = vshrl.u32 %v719, 7
        %v721 = vsub.s32 0, %v720
        %v722 = vrot.slane %v638, %v721
        %v723 = vadd.f32 %v716, %v722
        %724 = vadd.xlane.f32.xlu0 %v723
        %v725 = vpop.xlane.xlu0 %724
        %v726 = vmul.f32 %v725, 0.03125
        %v727 = vmul.f32 %v723, %v723
        %728 = vadd.xlane.f32.xlu0 %v727
        %v729 = vpop.xlane.xlu0 %728
        %v730 = vmul.f32 %v729, 0.03125
        %v731 = vmul.f32 %v726, %v726
        %v732 = vsub.f32 %v730, %v731
        %v733 = vadd.f32 %v732, 1e-05
        %v734 = vrsqrt.pop %v733
        %v735 = vsub.f32 %v723, %v726
        %v736 = vmul.f32 %v735, %v734
        %v737 = vld [vmem:[%s5] sm:$0x1]
        %v739 = vlaneseq
        %v740 = vshrl.u32 %v739, 7
        %v741 = vsub.s32 0, %v740
        %v742 = vrot.slane %v737, %v741
        %v744 = vmul.f32 %v736, %v742
        %v745 = vld [vmem:[%s6] sm:$0x1]
        %v747 = vlaneseq
        %v748 = vshrl.u32 %v747, 7
        %v749 = vsub.s32 0, %v748
        %v750 = vrot.slane %v745, %v749
        %v752 = vadd.f32 %v744, %v750
        %v753 = vld [vmem:[#allocation10] sm:$0xff]
        %v754 = vld [vmem:[#allocation10 + $0x8] sm:$0xff]
        %v755 = vld [vmem:[#allocation10 + $0x10] sm:$0xff]
        %v756 = vld [vmem:[#allocation10 + $0x18] sm:$0xff]
        %v757 = vld [vmem:[#allocation10 + $0x20] sm:$0xff]
        %v758 = vld [vmem:[#allocation10 + $0x28] sm:$0xff]
        %v759 = vld [vmem:[#allocation10 + $0x30] sm:$0xff]
        %v760 = vld [vmem:[#allocation10 + $0x38] sm:$0xff]
        %v761 = vld [vmem:[#allocation10 + $0x40] sm:$0xff]
        %v762 = vld [vmem:[#allocation10 + $0x48] sm:$0xff]
        %v763 = vld [vmem:[#allocation10 + $0x50] sm:$0xff]
        %v764 = vld [vmem:[#allocation10 + $0x58] sm:$0xff]
        %v765 = vld [vmem:[#allocation10 + $0x60] sm:$0xff]
        %v766 = vld [vmem:[#allocation10 + $0x68] sm:$0xff]
        %v767 = vld [vmem:[#allocation10 + $0x70] sm:$0xff]
        %v768 = vld [vmem:[#allocation10 + $0x78] sm:$0xff]
        %v769 = vld [vmem:[%s8] sm:$0x1]
        %v771 = vlaneseq
        %v772 = vshrl.u32 %v771, 7
        %v773 = vsub.s32 0, %v772
        %v774 = vrot.slane %v769, %v773
        %776 = vmatprep.subr.mxu0 0.0
        %777 = vmatpush1.msra.mxu0 %v753
        %778 = vmatprep.subr.mxu0 0.0
        %779 = vmatpush1.msra.mxu0 %v754
        %780 = vmatprep.subr.mxu0 0.0
        %781 = vmatpush1.msra.mxu0 %v755
        %782 = vmatprep.subr.mxu0 0.0
        %783 = vmatpush1.msra.mxu0 %v756
        %784 = vmatprep.subr.mxu0 0.0
        %785 = vmatpush1.msra.mxu0 %v757
        %786 = vmatprep.subr.mxu0 0.0
        %787 = vmatpush1.msra.mxu0 %v758
        %788 = vmatprep.subr.mxu0 0.0
        %789 = vmatpush1.msra.mxu0 %v759
        %790 = vmatprep.subr.mxu0 0.0
        %791 = vmatpush1.msra.mxu0 %v760
        %792 = vmatprep.subr.mxu0 0.0
        %793 = vmatpush1.msra.mxu0 %v761
        %794 = vmatprep.subr.mxu0 0.0
        %795 = vmatpush1.msra.mxu0 %v762
        %796 = vmatprep.subr.mxu0 0.0
        %797 = vmatpush1.msra.mxu0 %v763
        %798 = vmatprep.subr.mxu0 0.0
        %799 = vmatpush1.msra.mxu0 %v764
        %800 = vmatprep.subr.mxu0 0.0
        %801 = vmatpush1.msra.mxu0 %v765
        %802 = vmatprep.subr.mxu0 0.0
        %803 = vmatpush1.msra.mxu0 %v766
        %804 = vmatprep.subr.mxu0 0.0
        %805 = vmatpush1.msra.mxu0 %v767
        %806 = vmatprep.subr.mxu0 0.0
        %807 = vmatpush1.msra.mxu0 %v768
        %808 = vmatprep.subr.mxu0 0.0
        %809 = vmatpush1.msra.mxu0 0.0
        %810 = vmatprep.subr.mxu0 0.0
        %811 = vmatpush1.msra.mxu0 0.0
        %812 = vmatprep.subr.mxu0 0.0
        %813 = vmatpush1.msra.mxu0 0.0
        %814 = vmatprep.subr.mxu0 0.0
        %815 = vmatpush1.msra.mxu0 0.0
        %816 = vmatprep.subr.mxu0 0.0
        %817 = vmatpush1.msra.mxu0 0.0
        %818 = vmatprep.subr.mxu0 0.0
        %819 = vmatpush1.msra.mxu0 0.0
        %820 = vmatprep.subr.mxu0 0.0
        %821 = vmatpush1.msra.mxu0 0.0
        %822 = vmatprep.subr.mxu0 0.0
        %823 = vmatpush1.msra.mxu0 0.0
        %824 = vmatprep.subr.mxu0 0.0
        %825 = vmatpush1.msra.mxu0 0.0
        %826 = vmatprep.subr.mxu0 0.0
        %827 = vmatpush1.msra.mxu0 0.0
        %828 = vmatprep.subr.mxu0 0.0
        %829 = vmatpush1.msra.mxu0 0.0
        %830 = vmatprep.subr.mxu0 0.0
        %831 = vmatpush1.msra.mxu0 0.0
        %832 = vmatprep.subr.mxu0 0.0
        %833 = vmatpush1.msra.mxu0 0.0
        %834 = vmatprep.subr.mxu0 0.0
        %835 = vmatpush1.msra.mxu0 0.0
        %836 = vmatprep.subr.mxu0 0.0
        %837 = vmatpush1.msra.mxu0 0.0
        %838 = vmatprep.subr.mxu0 0.0
        %839 = vmatpush1.msra.mxu0 0.0
        %840 = vmatprep.mubr.f32.mxu0 0.0
        %841 = vmatmul.mubr.f32.gmra.mrb[0].mxu0 %v752
        %v842 = vpop.f32.mrb[0].mxu0
        %v843 = vadd.f32 %v774, %v842
        %v844 = vpop.f32.mrb[0].mxu0
        %845 = vdwg.mxu0
        %v846 = vld [vmem:[#allocation11] sm:$0xff]
        %v847 = vld [vmem:[#allocation11 + $0x8] sm:$0xff]
        %v848 = vld [vmem:[#allocation11 + $0x10] sm:$0xff]
        %v849 = vld [vmem:[#allocation11 + $0x18] sm:$0xff]
        %v850 = vld [vmem:[#allocation11 + $0x20] sm:$0xff]
        %v851 = vld [vmem:[#allocation11 + $0x28] sm:$0xff]
        %v852 = vld [vmem:[#allocation11 + $0x30] sm:$0xff]
        %v853 = vld [vmem:[#allocation11 + $0x38] sm:$0xff]
        %v854 = vld [vmem:[#allocation11 + $0x40] sm:$0xff]
        %v855 = vld [vmem:[#allocation11 + $0x48] sm:$0xff]
        %v856 = vld [vmem:[#allocation11 + $0x50] sm:$0xff]
        %v857 = vld [vmem:[#allocation11 + $0x58] sm:$0xff]
        %v858 = vld [vmem:[#allocation11 + $0x60] sm:$0xff]
        %v859 = vld [vmem:[#allocation11 + $0x68] sm:$0xff]
        %v860 = vld [vmem:[#allocation11 + $0x70] sm:$0xff]
        %v861 = vld [vmem:[#allocation11 + $0x78] sm:$0xff]
        %v862 = vld [vmem:[%s10] sm:$0x1]
        %v864 = vlaneseq
        %v865 = vshrl.u32 %v864, 7
        %v866 = vsub.s32 0, %v865
        %v867 = vrot.slane %v862, %v866
        %869 = vmatprep.subr.mxu0 0.0
        %870 = vmatpush1.msra.mxu0 %v846
        %871 = vmatprep.subr.mxu0 0.0
        %872 = vmatpush1.msra.mxu0 %v847
        %873 = vmatprep.subr.mxu0 0.0
        %874 = vmatpush1.msra.mxu0 %v848
        %875 = vmatprep.subr.mxu0 0.0
        %876 = vmatpush1.msra.mxu0 %v849
        %877 = vmatprep.subr.mxu0 0.0
        %878 = vmatpush1.msra.mxu0 %v850
        %879 = vmatprep.subr.mxu0 0.0
        %880 = vmatpush1.msra.mxu0 %v851
        %881 = vmatprep.subr.mxu0 0.0
        %882 = vmatpush1.msra.mxu0 %v852
        %883 = vmatprep.subr.mxu0 0.0
        %884 = vmatpush1.msra.mxu0 %v853
        %885 = vmatprep.subr.mxu0 0.0
        %886 = vmatpush1.msra.mxu0 %v854
        %887 = vmatprep.subr.mxu0 0.0
        %888 = vmatpush1.msra.mxu0 %v855
        %889 = vmatprep.subr.mxu0 0.0
        %890 = vmatpush1.msra.mxu0 %v856
        %891 = vmatprep.subr.mxu0 0.0
        %892 = vmatpush1.msra.mxu0 %v857
        %893 = vmatprep.subr.mxu0 0.0
        %894 = vmatpush1.msra.mxu0 %v858
        %895 = vmatprep.subr.mxu0 0.0
        %896 = vmatpush1.msra.mxu0 %v859
        %897 = vmatprep.subr.mxu0 0.0
        %898 = vmatpush1.msra.mxu0 %v860
        %899 = vmatprep.subr.mxu0 0.0
        %900 = vmatpush1.msra.mxu0 %v861
        %901 = vmatprep.subr.mxu0 0.0
        %902 = vmatpush1.msra.mxu0 0.0
        %903 = vmatprep.subr.mxu0 0.0
        %904 = vmatpush1.msra.mxu0 0.0
        %905 = vmatprep.subr.mxu0 0.0
        %906 = vmatpush1.msra.mxu0 0.0
        %907 = vmatprep.subr.mxu0 0.0
        %908 = vmatpush1.msra.mxu0 0.0
        %909 = vmatprep.subr.mxu0 0.0
        %910 = vmatpush1.msra.mxu0 0.0
        %911 = vmatprep.subr.mxu0 0.0
        %912 = vmatpush1.msra.mxu0 0.0
        %913 = vmatprep.subr.mxu0 0.0
        %914 = vmatpush1.msra.mxu0 0.0
        %915 = vmatprep.subr.mxu0 0.0
        %916 = vmatpush1.msra.mxu0 0.0
        %917 = vmatprep.subr.mxu0 0.0
        %918 = vmatpush1.msra.mxu0 0.0
        %919 = vmatprep.subr.mxu0 0.0
        %920 = vmatpush1.msra.mxu0 0.0
        %921 = vmatprep.subr.mxu0 0.0
        %922 = vmatpush1.msra.mxu0 0.0
        %923 = vmatprep.subr.mxu0 0.0
        %924 = vmatpush1.msra.mxu0 0.0
        %925 = vmatprep.subr.mxu0 0.0
        %926 = vmatpush1.msra.mxu0 0.0
        %927 = vmatprep.subr.mxu0 0.0
        %928 = vmatpush1.msra.mxu0 0.0
        %929 = vmatprep.subr.mxu0 0.0
        %930 = vmatpush1.msra.mxu0 0.0
        %931 = vmatprep.subr.mxu0 0.0
        %932 = vmatpush1.msra.mxu0 0.0
        %933 = vmatprep.mubr.f32.mxu0 0.0
        %934 = vmatmul.mubr.f32.gmra.mrb[0].mxu0 %v752
        %v935 = vpop.f32.mrb[0].mxu0
        %v936 = vadd.f32 %v867, %v935
        %v937 = vpop.f32.mrb[0].mxu0
        %938 = vdwg.mxu0
        %v939 = vld [vmem:[#allocation13] sm:$0xff]
        %v940 = vld [vmem:[#allocation13 + $0x8] sm:$0xff]
        %v941 = vld [vmem:[#allocation13 + $0x10] sm:$0xff]
        %v942 = vld [vmem:[#allocation13 + $0x18] sm:$0xff]
        %v943 = vld [vmem:[#allocation13 + $0x20] sm:$0xff]
        %v944 = vld [vmem:[#allocation13 + $0x28] sm:$0xff]
        %v945 = vld [vmem:[#allocation13 + $0x30] sm:$0xff]
        %v946 = vld [vmem:[#allocation13 + $0x38] sm:$0xff]
        %v947 = vld [vmem:[#allocation13 + $0x40] sm:$0xff]
        %v948 = vld [vmem:[#allocation13 + $0x48] sm:$0xff]
        %v949 = vld [vmem:[#allocation13 + $0x50] sm:$0xff]
        %v950 = vld [vmem:[#allocation13 + $0x58] sm:$0xff]
        %v951 = vld [vmem:[#allocation13 + $0x60] sm:$0xff]
        %v952 = vld [vmem:[#allocation13 + $0x68] sm:$0xff]
        %v953 = vld [vmem:[#allocation13 + $0x70] sm:$0xff]
        %v954 = vld [vmem:[#allocation13 + $0x78] sm:$0xff]
        %v955 = vld [vmem:[%s12] sm:$0x1]
        %v957 = vlaneseq
        %v958 = vshrl.u32 %v957, 7
        %v959 = vsub.s32 0, %v958
        %v960 = vrot.slane %v955, %v959
        %962 = vmatprep.subr.mxu0 0.0
        %963 = vmatpush1.msra.mxu0 %v939
        %964 = vmatprep.subr.mxu0 0.0
        %965 = vmatpush1.msra.mxu0 %v940
        %966 = vmatprep.subr.mxu0 0.0
        %967 = vmatpush1.msra.mxu0 %v941
        %968 = vmatprep.subr.mxu0 0.0
        %969 = vmatpush1.msra.mxu0 %v942
        %970 = vmatprep.subr.mxu0 0.0
        %971 = vmatpush1.msra.mxu0 %v943
        %972 = vmatprep.subr.mxu0 0.0
        %973 = vmatpush1.msra.mxu0 %v944
        %974 = vmatprep.subr.mxu0 0.0
        %975 = vmatpush1.msra.mxu0 %v945
        %976 = vmatprep.subr.mxu0 0.0
        %977 = vmatpush1.msra.mxu0 %v946
        %978 = vmatprep.subr.mxu0 0.0
        %979 = vmatpush1.msra.mxu0 %v947
        %980 = vmatprep.subr.mxu0 0.0
        %981 = vmatpush1.msra.mxu0 %v948
        %982 = vmatprep.subr.mxu0 0.0
        %983 = vmatpush1.msra.mxu0 %v949
        %984 = vmatprep.subr.mxu0 0.0
        %985 = vmatpush1.msra.mxu0 %v950
        %986 = vmatprep.subr.mxu0 0.0
        %987 = vmatpush1.msra.mxu0 %v951
        %988 = vmatprep.subr.mxu0 0.0
        %989 = vmatpush1.msra.mxu0 %v952
        %990 = vmatprep.subr.mxu0 0.0
        %991 = vmatpush1.msra.mxu0 %v953
        %992 = vmatprep.subr.mxu0 0.0
        %993 = vmatpush1.msra.mxu0 %v954
        %994 = vmatprep.subr.mxu0 0.0
        %995 = vmatpush1.msra.mxu0 0.0
        %996 = vmatprep.subr.mxu0 0.0
        %997 = vmatpush1.msra.mxu0 0.0
        %998 = vmatprep.subr.mxu0 0.0
        %999 = vmatpush1.msra.mxu0 0.0
        %1000 = vmatprep.subr.mxu0 0.0
        %1001 = vmatpush1.msra.mxu0 0.0
        %1002 = vmatprep.subr.mxu0 0.0
        %1003 = vmatpush1.msra.mxu0 0.0
        %1004 = vmatprep.subr.mxu0 0.0
        %1005 = vmatpush1.msra.mxu0 0.0
        %1006 = vmatprep.subr.mxu0 0.0
        %1007 = vmatpush1.msra.mxu0 0.0
        %1008 = vmatprep.subr.mxu0 0.0
        %1009 = vmatpush1.msra.mxu0 0.0
        %1010 = vmatprep.subr.mxu0 0.0
        %1011 = vmatpush1.msra.mxu0 0.0
        %1012 = vmatprep.subr.mxu0 0.0
        %1013 = vmatpush1.msra.mxu0 0.0
        %1014 = vmatprep.subr.mxu0 0.0
        %1015 = vmatpush1.msra.mxu0 0.0
        %1016 = vmatprep.subr.mxu0 0.0
        %1017 = vmatpush1.msra.mxu0 0.0
        %1018 = vmatprep.subr.mxu0 0.0
        %1019 = vmatpush1.msra.mxu0 0.0
        %1020 = vmatprep.subr.mxu0 0.0
        %1021 = vmatpush1.msra.mxu0 0.0
        %1022 = vmatprep.subr.mxu0 0.0
        %1023 = vmatpush1.msra.mxu0 0.0
        %1024 = vmatprep.subr.mxu0 0.0
        %1025 = vmatpush1.msra.mxu0 0.0
        %1026 = vmatprep.mubr.f32.mxu0 0.0
        %1027 = vmatmul.mubr.f32.gmra.mrb[0].mxu0 %v752
        %v1028 = vpop.f32.mrb[0].mxu0
        %v1029 = vadd.f32 %v960, %v1028
        %v1030 = vpop.f32.mrb[0].mxu0
        %1031 = vdwg.mxu0
        %1032 = vmatprep.subr.mxu0 0.0
        %1033 = vmatpush1.xpose.msra.mxu0 %v936
        %1034 = vmatprep.subr.mxu0 0.0
        %1035 = vmatpush1.xpose.msra.mxu0 0.0
        %1036 = vmatprep.subr.mxu0 0.0
        %1037 = vmatpush1.xpose.msra.mxu0 0.0
        %1038 = vmatprep.subr.mxu0 0.0
        %1039 = vmatpush1.xpose.msra.mxu0 0.0
        %1040 = vmatprep.subr.mxu0 0.0
        %1041 = vmatpush1.xpose.msra.mxu0 0.0
        %1042 = vmatprep.subr.mxu0 0.0
        %1043 = vmatpush1.xpose.msra.mxu0 0.0
        %1044 = vmatprep.subr.mxu0 0.0
        %1045 = vmatpush1.xpose.msra.mxu0 0.0
        %1046 = vmatprep.subr.mxu0 0.0
        %1047 = vmatpush1.xpose.msra.mxu0 0.0
        %1048 = vmatprep.subr.mxu0 0.0
        %1049 = vmatpush1.xpose.msra.mxu0 0.0
        %1050 = vmatprep.subr.mxu0 0.0
        %1051 = vmatpush1.xpose.msra.mxu0 0.0
        %1052 = vmatprep.subr.mxu0 0.0
        %1053 = vmatpush1.xpose.msra.mxu0 0.0
        %1054 = vmatprep.subr.mxu0 0.0
        %1055 = vmatpush1.xpose.msra.mxu0 0.0
        %1056 = vmatprep.subr.mxu0 0.0
        %1057 = vmatpush1.xpose.msra.mxu0 0.0
        %1058 = vmatprep.subr.mxu0 0.0
        %1059 = vmatpush1.xpose.msra.mxu0 0.0
        %1060 = vmatprep.subr.mxu0 0.0
        %1061 = vmatpush1.xpose.msra.mxu0 0.0
        %1062 = vmatprep.subr.mxu0 0.0
        %1063 = vmatpush1.xpose.msra.mxu0 0.0
        %1064 = vmatprep.subr.mxu0 0.0
        %1065 = vmatpush1.xpose.msra.mxu0 0.0
        %1066 = vmatprep.subr.mxu0 0.0
        %1067 = vmatpush1.xpose.msra.mxu0 0.0
        %1068 = vmatprep.subr.mxu0 0.0
        %1069 = vmatpush1.xpose.msra.mxu0 0.0
        %1070 = vmatprep.subr.mxu0 0.0
        %1071 = vmatpush1.xpose.msra.mxu0 0.0
        %1072 = vmatprep.subr.mxu0 0.0
        %1073 = vmatpush1.xpose.msra.mxu0 0.0
        %1074 = vmatprep.subr.mxu0 0.0
        %1075 = vmatpush1.xpose.msra.mxu0 0.0
        %1076 = vmatprep.subr.mxu0 0.0
        %1077 = vmatpush1.xpose.msra.mxu0 0.0
        %1078 = vmatprep.subr.mxu0 0.0
        %1079 = vmatpush1.xpose.msra.mxu0 0.0
        %1080 = vmatprep.subr.mxu0 0.0
        %1081 = vmatpush1.xpose.msra.mxu0 0.0
        %1082 = vmatprep.subr.mxu0 0.0
        %1083 = vmatpush1.xpose.msra.mxu0 0.0
        %1084 = vmatprep.subr.mxu0 0.0
        %1085 = vmatpush1.xpose.msra.mxu0 0.0
        %1086 = vmatprep.subr.mxu0 0.0
        %1087 = vmatpush1.xpose.msra.mxu0 0.0
        %1088 = vmatprep.subr.mxu0 0.0
        %1089 = vmatpush1.xpose.msra.mxu0 0.0
        %1090 = vmatprep.subr.mxu0 0.0
        %1091 = vmatpush1.xpose.msra.mxu0 0.0
        %1092 = vmatprep.subr.mxu0 0.0
        %1093 = vmatpush1.xpose.msra.mxu0 0.0
        %1094 = vmatprep.subr.mxu0 0.0
        %1095 = vmatpush1.xpose.msra.mxu0 0.0
        %1096 = vmatprep.mubr.f32.mxu0 0.0
        %1097 = vmatmul.mubr.f32.gmra.mrb[0].mxu0 %v843
        %v1098 = vpop.f32.mrb[0].mxu0
        %v1099 = vadd.f32 0.0, %v1098
        %v1100 = vpop.f32.mrb[0].mxu0
        %1101 = vdwg.mxu0
        %vm1102 = vcmask 64512
        %v1103 = vsel %vm1102, %v1099, -inf
        %1104 = vmax.xlane.f32.xlu0 %v1103
        %v1105 = vpop.xlane.xlu0 %1104
        %v1106 = vsub.f32 %v1099, %v1105
        %v1107 = vmul.f32 %v1106, 1.442695
        %v1108 = vpow.pop %v1107
        %v1109 = vsel %vm1102, %v1108, 0.0
        %1110 = vadd.xlane.f32.xlu0 %v1109
        %v1111 = vpop.xlane.xlu0 %1110
        %v1112 = vrcp.pop %v1111
        %v1113 = vmul.f32 %v1112, 0.17677669
        %v1114 = vmul.f32 %v1108, %v1113
        %v1116 = vsel %vm1102, %v1114, 0
        %1118 = vmatprep.subr.mxu0 0.0
        %1119 = vmatpush1.msra.mxu0 %v1029
        %1120 = vmatprep.subr.mxu0 0.0
        %1121 = vmatpush1.msra.mxu0 0.0
        %1122 = vmatprep.subr.mxu0 0.0
        %1123 = vmatpush1.msra.mxu0 0.0
        %1124 = vmatprep.subr.mxu0 0.0
        %1125 = vmatpush1.msra.mxu0 0.0
        %1126 = vmatprep.subr.mxu0 0.0
        %1127 = vmatpush1.msra.mxu0 0.0
        %1128 = vmatprep.subr.mxu0 0.0
        %1129 = vmatpush1.msra.mxu0 0.0
        %1130 = vmatprep.subr.mxu0 0.0
        %1131 = vmatpush1.msra.mxu0 0.0
        %1132 = vmatprep.subr.mxu0 0.0
        %1133 = vmatpush1.msra.mxu0 0.0
        %1134 = vmatprep.subr.mxu0 0.0
        %1135 = vmatpush1.msra.mxu0 0.0
        %1136 = vmatprep.subr.mxu0 0.0
        %1137 = vmatpush1.msra.mxu0 0.0
        %1138 = vmatprep.subr.mxu0 0.0
        %1139 = vmatpush1.msra.mxu0 0.0
        %1140 = vmatprep.subr.mxu0 0.0
        %1141 = vmatpush1.msra.mxu0 0.0
        %1142 = vmatprep.subr.mxu0 0.0
        %1143 = vmatpush1.msra.mxu0 0.0
        %1144 = vmatprep.subr.mxu0 0.0
        %1145 = vmatpush1.msra.mxu0 0.0
        %1146 = vmatprep.subr.mxu0 0.0
        %1147 = vmatpush1.msra.mxu0 0.0
        %1148 = vmatprep.subr.mxu0 0.0
        %1149 = vmatpush1.msra.mxu0 0.0
        %1150 = vmatprep.subr.mxu0 0.0
        %1151 = vmatpush1.msra.mxu0 0.0
        %1152 = vmatprep.subr.mxu0 0.0
        %1153 = vmatpush1.msra.mxu0 0.0
        %1154 = vmatprep.subr.mxu0 0.0
        %1155 = vmatpush1.msra.mxu0 0.0
        %1156 = vmatprep.subr.mxu0 0.0
        %1157 = vmatpush1.msra.mxu0 0.0
        %1158 = vmatprep.subr.mxu0 0.0
        %1159 = vmatpush1.msra.mxu0 0.0
        %1160 = vmatprep.subr.mxu0 0.0
        %1161 = vmatpush1.msra.mxu0 0.0
        %1162 = vmatprep.subr.mxu0 0.0
        %1163 = vmatpush1.msra.mxu0 0.0
        %1164 = vmatprep.subr.mxu0 0.0
        %1165 = vmatpush1.msra.mxu0 0.0
        %1166 = vmatprep.subr.mxu0 0.0
        %1167 = vmatpush1.msra.mxu0 0.0
        %1168 = vmatprep.subr.mxu0 0.0
        %1169 = vmatpush1.msra.mxu0 0.0
        %1170 = vmatprep.subr.mxu0 0.0
        %1171 = vmatpush1.msra.mxu0 0.0
        %1172 = vmatprep.subr.mxu0 0.0
        %1173 = vmatpush1.msra.mxu0 0.0
        %1174 = vmatprep.subr.mxu0 0.0
        %1175 = vmatpush1.msra.mxu0 0.0
        %1176 = vmatprep.subr.mxu0 0.0
        %1177 = vmatpush1.msra.mxu0 0.0
        %1178 = vmatprep.subr.mxu0 0.0
        %1179 = vmatpush1.msra.mxu0 0.0
        %1180 = vmatprep.subr.mxu0 0.0
        %1181 = vmatpush1.msra.mxu0 0.0
        %1182 = vmatprep.mubr.f32.mxu0 0.0
        %1183 = vmatmul.mubr.f32.gmra.mrb[0].mxu0 %v1116
        %v1184 = vpop.f32.mrb[0].mxu0
        %v1185 = vadd.f32 %v723, %v1184
        %v1186 = vpop.f32.mrb[0].mxu0
        %1187 = vdwg.mxu0
        %1188 = vst [vmem:[%s561] sm:$0xff] %v1185
        %s1189 = sand.u32 %s326, 1
        %s1190 = scalar_lea.sflag [#allocation4], %s1189
        %s1191 = sand.u32 %s326, 1
        %s1192 = smul.addr %s1191, 8
        %s1193 = scalar_lea.vmem [#allocation14], %s1192
        // Predicated region
        $region101: #{tpu_custom_call.1} parent=71 // pred_check
          %p1194 = pneg %p336
        $region102: #{tpu_custom_call.1} parent=71 // pred_check_branch
          %1196 = sbr.rel (%p1194) target = $region104
        $region103: #{tpu_custom_call.1} parent=71 // pred_region
          %s1198 = ssub.s32 128, 128
          %1199 = vsyncadd %s1190, %s1198
          %s1200 = smul.addr %s35, 128
          %s1201 = scalar_lea.hbm %s13, %s1200
          %s1203 = sshll.u32 %s1193, 4
          %s1204 = int_to_ptr.vmem [resolvable:$true] %s1203
          %1206 = dma.vmem_to_hbm [thread:$0]  %s1204, 128, %s1201, %s1190
        $region104: #{tpu_custom_call.1} parent=71 // pred_fallthru
          _
      $region72: #{tpu_custom_call.1} parent=5 // pred_fallthru
        _
      %p1207 = scmp.le.s32.totalorder 2, %s30
      // Predicated region
      $region105: #{tpu_custom_call.1} parent=5 // pred_check
        %p1208 = pneg %p1207
      $region106: #{tpu_custom_call.1} parent=5 // pred_check_branch
        %1210 = sbr.rel (%p1208) target = $region108
      $region107: #{tpu_custom_call.1} parent=5 // pred_region
        %s1211 = ssub.s32 %s30, 2
        // Predicated region
        $region109: #{tpu_custom_call.1} parent=107 // pred_check
          %p1212 = pneg %p342
        $region110: #{tpu_custom_call.1} parent=107 // pred_check_branch
          %1214 = sbr.rel (%p1212) target = $region112
        $region111: #{tpu_custom_call.1} parent=107 // pred_region
          %s1215 = sand.u32 %s327, 1
          %s1216 = scalar_lea.sflag [#allocation4], %s1215
          %s1217 = sand.u32 %s327, 1
          %s1218 = smul.addr %s1217, 8
          %s1219 = scalar_lea.vmem [#allocation14], %s1218
          %1220 = dma.done %s1216, 128
        $region112: #{tpu_custom_call.1} parent=107 // pred_fallthru
          _
      $region108: #{tpu_custom_call.1} parent=5 // pred_fallthru
        _
    $region6: #{tpu_custom_call.1} parent=1 // loop_footer
      %s34 = sadd.s32 1, %s30
    $region7: #{tpu_custom_call.1} parent=1 // loop_footer_branch
      %29 = sbr.rel target = $region3
    $region8: #{tpu_custom_call.1} parent=1 // loop_exit
      _
    %1221 = vsyncpa [#allocation3], 1
    %s1222 = scalar_lea.sflag [#allocation3], 1
    %1223 = vsyncpa %s1222, 1
    %1224 = vsyncpa [#allocation6], 1
    %s1225 = scalar_lea.sflag [#allocation6], 1
    %1226 = vsyncpa %s1225, 1
    %1227 = vsyncpa [#allocation9], 1
    %1228 = vsyncpa [#allocation12], 1
    %1229 = vsyncpa [#allocation4], 1
    %s1230 = scalar_lea.sflag [#allocation4], 1
    %1231 = vsyncpa %s1230, 1

</llo_original>
